<compile_context>
chip_gen: v5e
topology: v5e:2x2
jax: 0.10.0
libtpu: 0.0.40
codegen_flags: <defaults>
</compile_context>

<pallas_src>
import functools
import math

import jax
import jax.numpy as jnp
from jax.experimental import pallas as pl
from jax.experimental.pallas import tpu as pltpu

_LN_EPS = 1e-5
_INV_SQRT2 = 1.0 / math.sqrt(2.0)


def _layernorm(x, gamma, beta):
    mu = jnp.mean(x, axis=-1, keepdims=True)
    xc = x - mu
    var = jnp.mean(xc * xc, axis=-1, keepdims=True)
    return xc * jax.lax.rsqrt(var + _LN_EPS) * gamma + beta


def _token_performer_kernel(
    x_ref,                       # (M, dim) f32, M = Bb*N rows of this batch tile
    g1_ref, bt1_ref,             # norm1: (1, dim) f32
    wq_ref, bq_ref,              # q_linear (padded): (dim, P) bf16, (1, P) f32
    w0_ref,                      # linear_0^T (padded rows): (P, k) bf16
    wf_ref, bf_ref,              # folded linear_1@proj (padded): (k, P) bf16, (1, P) f32
    g2_ref, bt2_ref,             # norm2: (1, in_dim) f32
    wf1_ref, bf1_ref,            # mlp.fc1^T: (in_dim, in_dim) bf16, (1, in_dim) f32
    wf2_ref, bf2_ref,            # mlp.fc2^T (padded): (in_dim, P) bf16, (1, P) f32
    o_ref,                       # (M, P) f32 (lane-dense; cols >= in_dim are zero)
    *, Bb, N, in_dim,
):
    M = Bb * N
    k = w0_ref.shape[1]

    x = x_ref[...]                                                  # (M, dim) f32

    # ---- norm1 (f32) ----
    xn = _layernorm(x, g1_ref[...], bt1_ref[...])

    # ---- q_linear; padded output columns are exact zeros ----
    q = jnp.dot(xn.astype(jnp.bfloat16), wq_ref[...],
                preferred_element_type=jnp.float32) + bq_ref[...]   # (M, P)

    # ---- external-attention: logits -> softmax over sequence -> row norm ----
    a = jnp.dot(q.astype(jnp.bfloat16), w0_ref[...],
                preferred_element_type=jnp.float32)                 # (M, k)
    a3 = a.reshape(Bb, N, k)                                        # per-batch view
    a3 = a3 - jnp.max(a3, axis=1, keepdims=True)                    # softmax(dim=-2)
    e = jnp.exp(a3)
    attn = e * pl.reciprocal(jnp.sum(e, axis=1, keepdims=True), approx=True)
    attn = attn * pl.reciprocal(1e-9 + jnp.sum(attn, axis=-1, keepdims=True),
                                approx=True)                        # row-normalize
    attn = attn.reshape(M, k)

    # ---- fused linear_1 @ proj (pre-folded offline; exact in eval mode) ----
    y = jnp.dot(attn.astype(jnp.bfloat16), wf_ref[...],
                preferred_element_type=jnp.float32) + bf_ref[...]   # (M, P)
    x2 = q + y                                                      # residual (idn = q)

    # ---- norm2 + MLP (exact erf GELU) on the real in_dim features ----
    xn2 = _layernorm(x2[:, :in_dim], g2_ref[...], bt2_ref[...])
    h = jnp.dot(xn2.astype(jnp.bfloat16), wf1_ref[...],
                preferred_element_type=jnp.float32) + bf1_ref[...]
    h = 0.5 * h * (1.0 + jax.lax.erf(h * _INV_SQRT2))
    h = jnp.dot(h.astype(jnp.bfloat16), wf2_ref[...],
                preferred_element_type=jnp.float32) + bf2_ref[...]  # (M, P), pad cols 0

    o_ref[...] = x2 + h                                             # lane-dense store


def token_performer(x, p, *, batch_block=None):
    """x: (B, N, dim) f32, p: dict of f32 parameters (weights pre-transposed)."""
    B, N, dim = x.shape
    in_dim = p["wq_t"].shape[1]
    k = p["w0_t"].shape[1]
    P = ((in_dim + 127) // 128) * 128          # lane-dense padded feature width

    # ---- offline parameter prep (exact in eval mode) ----
    w_fold = p["w1_t"] @ p["wp_t"]             # (k, in_dim): linear_1 then proj
    b_fold = p["b1"] @ p["wp_t"] + p["bp"]     # (1, in_dim)

    bf16 = jnp.bfloat16
    padc = lambda a: jnp.pad(a, ((0, 0), (0, P - in_dim)))   # pad feature columns
    wq_p = padc(p["wq_t"]).astype(bf16)                       # (dim, P)
    bq_p = padc(p["bq"])                                      # (1, P) f32
    w0_p = jnp.pad(p["w0_t"], ((0, P - in_dim), (0, 0))).astype(bf16)   # (P, k)
    wf_p = padc(w_fold).astype(bf16)                          # (k, P)
    bf_p = padc(b_fold)                                       # (1, P)
    wf1 = p["wf1_t"].astype(bf16)                             # (in_dim, in_dim)
    wf2_p = padc(p["wf2_t"]).astype(bf16)                     # (in_dim, P)
    bf2_p = padc(p["bf2"])                                    # (1, P)

    # ---- batch tiling: fold Bb batches into the matmul M dim; keep >= 2 grid
    #      steps when possible so both v7x TensorCores are used ----
    if batch_block is None:
        batch_block = 1
        for bb in range(1, B + 1):
            if B % bb == 0 and B // bb >= 2 and bb * N <= 512:
                batch_block = bb
    Bb = batch_block
    G = B // Bb
    M = Bb * N

    x2d = x.reshape(B * N, dim)

    row_spec = lambda shape: pl.BlockSpec(shape, lambda i: (i, 0))
    full_spec = lambda shape: pl.BlockSpec(shape, lambda i: (0, 0))

    flops = 2 * B * N * (dim * P + P * k + k * P + in_dim * in_dim + in_dim * P)
    transcendentals = B * N * (k + in_dim)
    bytes_accessed = int(
        x2d.size * 4 + B * N * P * 4
        + 2 * (wq_p.size + w0_p.size + wf_p.size + wf1.size + wf2_p.size)
        + 4 * (bq_p.size + bf_p.size + p["bf1"].size + bf2_p.size
               + p["g1"].size + p["bt1"].size + p["g2"].size + p["bt2"].size))

    kernel = functools.partial(_token_performer_kernel, Bb=Bb, N=N, in_dim=in_dim)

    out = pl.pallas_call(
        kernel,
        out_shape=jax.ShapeDtypeStruct((B * N, P), jnp.float32),
        grid=(G,),
        in_specs=[
            row_spec((M, dim)),                                  # x tile
            full_spec((1, dim)), full_spec((1, dim)),            # norm1
            full_spec((dim, P)), full_spec((1, P)),              # q_linear (padded)
            full_spec((P, k)),                                   # linear_0 (padded)
            full_spec((k, P)), full_spec((1, P)),                # folded linear_1@proj
            full_spec((1, in_dim)), full_spec((1, in_dim)),      # norm2
            full_spec((in_dim, in_dim)), full_spec((1, in_dim)), # mlp.fc1
            full_spec((in_dim, P)), full_spec((1, P)),           # mlp.fc2 (padded)
        ],
        out_specs=row_spec((M, P)),
        compiler_params=pltpu.CompilerParams(
            dimension_semantics=("parallel",),
            # NOTE(v7x): for production sizes, single-buffer the grid-invariant
            # weight specs and budget VMEM for the 64 MiB cap (vmem_limit_bytes);
            # at these shapes everything fits well under the default scoped limit.
        ),
        cost_estimate=pl.CostEstimate(
            flops=flops,
            transcendentals=transcendentals,
            bytes_accessed=bytes_accessed,
        ),
    )(
        x2d,
        p["g1"], p["bt1"],
        wq_p, bq_p,
        w0_p,
        wf_p, bf_p,
        p["g2"], p["bt2"],
        wf1, p["bf1"],
        wf2_p, bf2_p,
    )
    # Padded lanes (>= in_dim) are exactly zero; slice them off and restore (B, N, in_dim).
    return out[:, :in_dim].reshape(B, N, in_dim)


def make_params(key, dim, in_dim, k=128):
    """Deterministic synthetic parameters matching the PyTorch module's shapes (f32)."""
    keys = jax.random.split(key, 8)
    s = 0.05
    # q_linear: weight (in_dim, dim) in torch -> store transposed (dim, in_dim)
    wq = jax.random.normal(keys[0], (in_dim, dim), jnp.float32) * s
    bq = jax.random.normal(keys[1], (1, in_dim), jnp.float32) * s
    # linear_0: weight (k, in_dim), no bias; linear_1.weight = linear_0.weight.T
    w0 = jax.random.normal(keys[2], (k, in_dim), jnp.float32) * s
    b1 = jax.random.normal(keys[3], (1, in_dim), jnp.float32) * s
    # proj: (in_dim, in_dim)
    wp = jax.random.normal(keys[4], (in_dim, in_dim), jnp.float32) * s
    bp = jax.random.normal(keys[5], (1, in_dim), jnp.float32) * s
    # mlp: fc1 (in_dim, in_dim), fc2 (in_dim, in_dim)
    wf1 = jax.random.normal(keys[6], (in_dim, in_dim), jnp.float32) * s
    bf1 = jnp.zeros((1, in_dim), jnp.float32)
    wf2 = jax.random.normal(keys[7], (in_dim, in_dim), jnp.float32) * s
    bf2 = jnp.zeros((1, in_dim), jnp.float32)
    return {
        "g1": jnp.ones((1, dim), jnp.float32),
        "bt1": jnp.zeros((1, dim), jnp.float32),
        "wq_t": wq.T,                # (dim, in_dim)
        "bq": bq,
        "w0_t": w0.T,                # (in_dim, k)
        "w1_t": w0,                  # linear_1.weight.T == linear_0.weight  (k, in_dim)
        "b1": b1,
        "wp_t": wp.T,
        "bp": bp,
        "g2": jnp.ones((1, in_dim), jnp.float32),
        "bt2": jnp.zeros((1, in_dim), jnp.float32),
        "wf1_t": wf1.T,
        "bf1": bf1,
        "wf2_t": wf2.T,
        "bf2": bf2,
    }


def ref_forward(x, p):
    """Pure-JAX f32 reference mirroring the PyTorch forward (eval mode)."""
    def ln(v, g, b):
        mu = v.mean(-1, keepdims=True)
        var = ((v - mu) ** 2).mean(-1, keepdims=True)
        return (v - mu) / jnp.sqrt(var + _LN_EPS) * g + b

    xn = ln(x, p["g1"], p["bt1"])
    q = xn @ p["wq_t"] + p["bq"]
    a = q @ p["w0_t"]
    a = jax.nn.softmax(a, axis=-2)
    a = a / (1e-9 + a.sum(-1, keepdims=True))
    y = a @ p["w1_t"] + p["b1"]
    y = y @ p["wp_t"] + p["bp"]
    x2 = q + y
    xn2 = ln(x2, p["g2"], p["bt2"])
    h = xn2 @ p["wf1_t"] + p["bf1"]
    h = 0.5 * h * (1.0 + jax.lax.erf(h * _INV_SQRT2))
    return x2 + (h @ p["wf2_t"] + p["bf2"])


if __name__ == "__main__":
    B, N, dim, in_dim = 4, 16, 32, 64

    key = jax.random.PRNGKey(0)
    kx, kp = jax.random.split(key)
    x = jax.random.normal(kx, (B, N, dim), jnp.float32)
    params = make_params(kp, dim, in_dim)

    out = token_performer(x, params)
    out = jax.block_until_ready(out)

    ref = ref_forward(x, params)
    assert out.shape == (B, N, in_dim)
    # bf16 matmul operands (f32 accumulation) -> compare against f32 reference
    # at a correspondingly relaxed tolerance.
    assert jnp.allclose(out, ref, rtol=2e-2, atol=2e-2), "mismatch vs reference"

    print("KERNEL_OK")
</pallas_src>

<mosaic_0001>
module attributes {stable_mosaic.version = 11 : i64} {
  func.func @_token_performer_kernel(%arg0: i32, %arg1: memref<32x32xf32, #tpu.memory_space<vmem>>, %arg2: memref<1x32xf32, #tpu.memory_space<vmem>>, %arg3: memref<1x32xf32, #tpu.memory_space<vmem>>, %arg4: memref<32x128xbf16, #tpu.memory_space<vmem>>, %arg5: memref<1x128xf32, #tpu.memory_space<vmem>>, %arg6: memref<128x128xbf16, #tpu.memory_space<vmem>>, %arg7: memref<128x128xbf16, #tpu.memory_space<vmem>>, %arg8: memref<1x128xf32, #tpu.memory_space<vmem>>, %arg9: memref<1x64xf32, #tpu.memory_space<vmem>>, %arg10: memref<1x64xf32, #tpu.memory_space<vmem>>, %arg11: memref<64x64xbf16, #tpu.memory_space<vmem>>, %arg12: memref<1x64xf32, #tpu.memory_space<vmem>>, %arg13: memref<64x128xbf16, #tpu.memory_space<vmem>>, %arg14: memref<1x128xf32, #tpu.memory_space<vmem>>, %arg15: memref<32x128xf32, #tpu.memory_space<vmem>>) attributes {dimension_semantics = [#tpu.dimension_semantics<parallel>], iteration_bounds = array<i64: 2>, scalar_prefetch = 0 : i64, scratch_operands = 0 : i64, tpu.core_type = #tpu.core_type<tc>, window_params = [{transform_indices = @transform_0, window_bounds = array<i64: 32, 32>}, {pipeline_mode = #tpu.pipeline_mode<synchronous>, transform_indices = @transform_1, window_bounds = array<i64: 1, 32>}, {pipeline_mode = #tpu.pipeline_mode<synchronous>, transform_indices = @transform_2, window_bounds = array<i64: 1, 32>}, {pipeline_mode = #tpu.pipeline_mode<synchronous>, transform_indices = @transform_3, window_bounds = array<i64: 32, 128>}, {pipeline_mode = #tpu.pipeline_mode<synchronous>, transform_indices = @transform_4, window_bounds = array<i64: 1, 128>}, {pipeline_mode = #tpu.pipeline_mode<synchronous>, transform_indices = @transform_5, window_bounds = array<i64: 128, 128>}, {pipeline_mode = #tpu.pipeline_mode<synchronous>, transform_indices = @transform_6, window_bounds = array<i64: 128, 128>}, {pipeline_mode = #tpu.pipeline_mode<synchronous>, transform_indices = @transform_7, window_bounds = array<i64: 1, 128>}, {pipeline_mode = #tpu.pipeline_mode<synchronous>, transform_indices = @transform_8, window_bounds = array<i64: 1, 64>}, {pipeline_mode = #tpu.pipeline_mode<synchronous>, transform_indices = @transform_9, window_bounds = array<i64: 1, 64>}, {pipeline_mode = #tpu.pipeline_mode<synchronous>, transform_indices = @transform_10, window_bounds = array<i64: 64, 64>}, {pipeline_mode = #tpu.pipeline_mode<synchronous>, transform_indices = @transform_11, window_bounds = array<i64: 1, 64>}, {pipeline_mode = #tpu.pipeline_mode<synchronous>, transform_indices = @transform_12, window_bounds = array<i64: 64, 128>}, {pipeline_mode = #tpu.pipeline_mode<synchronous>, transform_indices = @transform_13, window_bounds = array<i64: 1, 128>}, {transform_indices = @transform_14, window_bounds = array<i64: 32, 128>}]} {
    %c0 = arith.constant 0 : index
    %c0_0 = arith.constant 0 : index
    %0 = vector.load %arg1[%c0, %c0_0] : memref<32x32xf32, #tpu.memory_space<vmem>>, vector<32x32xf32>
    %c0_1 = arith.constant 0 : index
    %c0_2 = arith.constant 0 : index
    %1 = vector.load %arg2[%c0_1, %c0_2] : memref<1x32xf32, #tpu.memory_space<vmem>>, vector<1x32xf32>
    %c0_3 = arith.constant 0 : index
    %c0_4 = arith.constant 0 : index
    %2 = vector.load %arg3[%c0_3, %c0_4] : memref<1x32xf32, #tpu.memory_space<vmem>>, vector<1x32xf32>
    %cst = arith.constant dense<0.000000e+00> : vector<32xf32>
    %3 = vector.multi_reduction <add>, %0, %cst [1] : vector<32x32xf32> to vector<32xf32>
    %4 = vector.shape_cast %3 : vector<32xf32> to vector<32x1xf32>
    %cst_5 = arith.constant 3.200000e+01 : f32
    %5 = vector.broadcast %cst_5 : f32 to vector<32x1xf32>
    %6 = arith.divf %4, %5 : vector<32x1xf32>
    %7 = vector.broadcast %6 : vector<32x1xf32> to vector<32x32xf32>
    %8 = arith.subf %0, %7 : vector<32x32xf32>
    %9 = arith.mulf %8, %8 : vector<32x32xf32>
    %cst_6 = arith.constant dense<0.000000e+00> : vector<32xf32>
    %10 = vector.multi_reduction <add>, %9, %cst_6 [1] : vector<32x32xf32> to vector<32xf32>
    %11 = vector.shape_cast %10 : vector<32xf32> to vector<32x1xf32>
    %cst_7 = arith.constant 3.200000e+01 : f32
    %12 = vector.broadcast %cst_7 : f32 to vector<32x1xf32>
    %13 = arith.divf %11, %12 : vector<32x1xf32>
    %cst_8 = arith.constant 9.99999974E-6 : f32
    %14 = vector.broadcast %cst_8 : f32 to vector<32x1xf32>
    %15 = arith.addf %13, %14 : vector<32x1xf32>
    %16 = math.rsqrt %15 : vector<32x1xf32>
    %17 = vector.broadcast %16 : vector<32x1xf32> to vector<32x32xf32>
    %18 = arith.mulf %8, %17 : vector<32x32xf32>
    %19 = vector.broadcast %1 : vector<1x32xf32> to vector<32x32xf32>
    %20 = arith.mulf %18, %19 : vector<32x32xf32>
    %21 = vector.broadcast %2 : vector<1x32xf32> to vector<32x32xf32>
    %22 = arith.addf %20, %21 : vector<32x32xf32>
    %23 = arith.truncf %22 : vector<32x32xf32> to vector<32x32xbf16>
    %c0_9 = arith.constant 0 : index
    %c0_10 = arith.constant 0 : index
    %24 = vector.load %arg4[%c0_9, %c0_10] : memref<32x128xbf16, #tpu.memory_space<vmem>>, vector<32x128xbf16>
    %cst_11 = arith.constant dense<0.000000e+00> : vector<32x128xf32>
    %25 = tpu.matmul %23, %24, %cst_11 {dimension_numbers = #tpu.dot_dimension_numbers<[1], [0], [0], [1], [0, 0, 1, 1], [], []>} : vector<32x32xbf16>, vector<32x128xbf16>, vector<32x128xf32> -> vector<32x128xf32>
    %c0_12 = arith.constant 0 : index
    %c0_13 = arith.constant 0 : index
    %26 = vector.load %arg5[%c0_12, %c0_13] : memref<1x128xf32, #tpu.memory_space<vmem>>, vector<1x128xf32>
    %27 = vector.broadcast %26 : vector<1x128xf32> to vector<32x128xf32>
    %28 = arith.addf %25, %27 : vector<32x128xf32>
    %29 = arith.truncf %28 : vector<32x128xf32> to vector<32x128xbf16>
    %c0_14 = arith.constant 0 : index
    %c0_15 = arith.constant 0 : index
    %30 = vector.load %arg6[%c0_14, %c0_15] : memref<128x128xbf16, #tpu.memory_space<vmem>>, vector<128x128xbf16>
    %cst_16 = arith.constant dense<0.000000e+00> : vector<32x128xf32>
    %31 = tpu.matmul %29, %30, %cst_16 {dimension_numbers = #tpu.dot_dimension_numbers<[1], [0], [0], [1], [0, 0, 1, 1], [], []>} : vector<32x128xbf16>, vector<128x128xbf16>, vector<32x128xf32> -> vector<32x128xf32>
    %32 = vector.shape_cast %31 : vector<32x128xf32> to vector<2x16x128xf32>
    %cst_17 = arith.constant dense<0xFF800000> : vector<2x128xf32>
    %33 = vector.multi_reduction <maximumf>, %32, %cst_17 [1] : vector<2x16x128xf32> to vector<2x128xf32>
    %34 = vector.shape_cast %33 : vector<2x128xf32> to vector<2x1x128xf32>
    %35 = vector.broadcast %34 : vector<2x1x128xf32> to vector<2x16x128xf32>
    %36 = arith.subf %32, %35 : vector<2x16x128xf32>
    %37 = math.exp %36 : vector<2x16x128xf32>
    %cst_18 = arith.constant dense<0.000000e+00> : vector<2x128xf32>
    %38 = vector.multi_reduction <add>, %37, %cst_18 [1] : vector<2x16x128xf32> to vector<2x128xf32>
    %39 = vector.shape_cast %38 : vector<2x128xf32> to vector<2x1x128xf32>
    %40 = tpu.reciprocal %39 {approx = true} : vector<2x1x128xf32> -> vector<2x1x128xf32>
    %41 = vector.broadcast %40 : vector<2x1x128xf32> to vector<2x16x128xf32>
    %42 = arith.mulf %37, %41 : vector<2x16x128xf32>
    %cst_19 = arith.constant dense<0.000000e+00> : vector<2x16xf32>
    %43 = vector.multi_reduction <add>, %42, %cst_19 [2] : vector<2x16x128xf32> to vector<2x16xf32>
    %44 = vector.shape_cast %43 : vector<2x16xf32> to vector<2x16x1xf32>
    %cst_20 = arith.constant 9.99999971E-10 : f32
    %45 = vector.broadcast %cst_20 : f32 to vector<2x16x1xf32>
    %46 = arith.addf %45, %44 : vector<2x16x1xf32>
    %47 = tpu.reciprocal %46 {approx = true} : vector<2x16x1xf32> -> vector<2x16x1xf32>
    %48 = vector.broadcast %47 : vector<2x16x1xf32> to vector<2x16x128xf32>
    %49 = arith.mulf %42, %48 : vector<2x16x128xf32>
    %50 = vector.shape_cast %49 : vector<2x16x128xf32> to vector<32x128xf32>
    %51 = arith.truncf %50 : vector<32x128xf32> to vector<32x128xbf16>
    %c0_21 = arith.constant 0 : index
    %c0_22 = arith.constant 0 : index
    %52 = vector.load %arg7[%c0_21, %c0_22] : memref<128x128xbf16, #tpu.memory_space<vmem>>, vector<128x128xbf16>
    %cst_23 = arith.constant dense<0.000000e+00> : vector<32x128xf32>
    %53 = tpu.matmul %51, %52, %cst_23 {dimension_numbers = #tpu.dot_dimension_numbers<[1], [0], [0], [1], [0, 0, 1, 1], [], []>} : vector<32x128xbf16>, vector<128x128xbf16>, vector<32x128xf32> -> vector<32x128xf32>
    %c0_24 = arith.constant 0 : index
    %c0_25 = arith.constant 0 : index
    %54 = vector.load %arg8[%c0_24, %c0_25] : memref<1x128xf32, #tpu.memory_space<vmem>>, vector<1x128xf32>
    %55 = vector.broadcast %54 : vector<1x128xf32> to vector<32x128xf32>
    %56 = arith.addf %53, %55 : vector<32x128xf32>
    %57 = arith.addf %28, %56 : vector<32x128xf32>
    %58 = vector.extract_strided_slice %57 {offsets = [0, 0], sizes = [32, 64], strides = [1, 1]} : vector<32x128xf32> to vector<32x64xf32>
    %c0_26 = arith.constant 0 : index
    %c0_27 = arith.constant 0 : index
    %59 = vector.load %arg9[%c0_26, %c0_27] : memref<1x64xf32, #tpu.memory_space<vmem>>, vector<1x64xf32>
    %c0_28 = arith.constant 0 : index
    %c0_29 = arith.constant 0 : index
    %60 = vector.load %arg10[%c0_28, %c0_29] : memref<1x64xf32, #tpu.memory_space<vmem>>, vector<1x64xf32>
    %cst_30 = arith.constant dense<0.000000e+00> : vector<32xf32>
    %61 = vector.multi_reduction <add>, %58, %cst_30 [1] : vector<32x64xf32> to vector<32xf32>
    %62 = vector.shape_cast %61 : vector<32xf32> to vector<32x1xf32>
    %cst_31 = arith.constant 6.400000e+01 : f32
    %63 = vector.broadcast %cst_31 : f32 to vector<32x1xf32>
    %64 = arith.divf %62, %63 : vector<32x1xf32>
    %65 = vector.broadcast %64 : vector<32x1xf32> to vector<32x64xf32>
    %66 = arith.subf %58, %65 : vector<32x64xf32>
    %67 = arith.mulf %66, %66 : vector<32x64xf32>
    %cst_32 = arith.constant dense<0.000000e+00> : vector<32xf32>
    %68 = vector.multi_reduction <add>, %67, %cst_32 [1] : vector<32x64xf32> to vector<32xf32>
    %69 = vector.shape_cast %68 : vector<32xf32> to vector<32x1xf32>
    %cst_33 = arith.constant 6.400000e+01 : f32
    %70 = vector.broadcast %cst_33 : f32 to vector<32x1xf32>
    %71 = arith.divf %69, %70 : vector<32x1xf32>
    %cst_34 = arith.constant 9.99999974E-6 : f32
    %72 = vector.broadcast %cst_34 : f32 to vector<32x1xf32>
    %73 = arith.addf %71, %72 : vector<32x1xf32>
    %74 = math.rsqrt %73 : vector<32x1xf32>
    %75 = vector.broadcast %74 : vector<32x1xf32> to vector<32x64xf32>
    %76 = arith.mulf %66, %75 : vector<32x64xf32>
    %77 = vector.broadcast %59 : vector<1x64xf32> to vector<32x64xf32>
    %78 = arith.mulf %76, %77 : vector<32x64xf32>
    %79 = vector.broadcast %60 : vector<1x64xf32> to vector<32x64xf32>
    %80 = arith.addf %78, %79 : vector<32x64xf32>
    %81 = arith.truncf %80 : vector<32x64xf32> to vector<32x64xbf16>
    %c0_35 = arith.constant 0 : index
    %c0_36 = arith.constant 0 : index
    %82 = vector.load %arg11[%c0_35, %c0_36] : memref<64x64xbf16, #tpu.memory_space<vmem>>, vector<64x64xbf16>
    %cst_37 = arith.constant dense<0.000000e+00> : vector<32x64xf32>
    %83 = tpu.matmul %81, %82, %cst_37 {dimension_numbers = #tpu.dot_dimension_numbers<[1], [0], [0], [1], [0, 0, 1, 1], [], []>} : vector<32x64xbf16>, vector<64x64xbf16>, vector<32x64xf32> -> vector<32x64xf32>
    %c0_38 = arith.constant 0 : index
    %c0_39 = arith.constant 0 : index
    %84 = vector.load %arg12[%c0_38, %c0_39] : memref<1x64xf32, #tpu.memory_space<vmem>>, vector<1x64xf32>
    %85 = vector.broadcast %84 : vector<1x64xf32> to vector<32x64xf32>
    %86 = arith.addf %83, %85 : vector<32x64xf32>
    %cst_40 = arith.constant 5.000000e-01 : f32
    %87 = vector.broadcast %cst_40 : f32 to vector<32x64xf32>
    %88 = arith.mulf %87, %86 : vector<32x64xf32>
    %cst_41 = arith.constant 0.707106769 : f32
    %89 = vector.broadcast %cst_41 : f32 to vector<32x64xf32>
    %90 = arith.mulf %86, %89 : vector<32x64xf32>
    %91 = math.erf %90 : vector<32x64xf32>
    %cst_42 = arith.constant 1.000000e+00 : f32
    %92 = vector.broadcast %cst_42 : f32 to vector<32x64xf32>
    %93 = arith.addf %92, %91 : vector<32x64xf32>
    %94 = arith.mulf %88, %93 : vector<32x64xf32>
    %95 = arith.truncf %94 : vector<32x64xf32> to vector<32x64xbf16>
    %c0_43 = arith.constant 0 : index
    %c0_44 = arith.constant 0 : index
    %96 = vector.load %arg13[%c0_43, %c0_44] : memref<64x128xbf16, #tpu.memory_space<vmem>>, vector<64x128xbf16>
    %cst_45 = arith.constant dense<0.000000e+00> : vector<32x128xf32>
    %97 = tpu.matmul %95, %96, %cst_45 {dimension_numbers = #tpu.dot_dimension_numbers<[1], [0], [0], [1], [0, 0, 1, 1], [], []>} : vector<32x64xbf16>, vector<64x128xbf16>, vector<32x128xf32> -> vector<32x128xf32>
    %c0_46 = arith.constant 0 : index
    %c0_47 = arith.constant 0 : index
    %98 = vector.load %arg14[%c0_46, %c0_47] : memref<1x128xf32, #tpu.memory_space<vmem>>, vector<1x128xf32>
    %99 = vector.broadcast %98 : vector<1x128xf32> to vector<32x128xf32>
    %100 = arith.addf %97, %99 : vector<32x128xf32>
    %101 = arith.addf %57, %100 : vector<32x128xf32>
    %c0_48 = arith.constant 0 : index
    %c0_49 = arith.constant 0 : index
    %102 = vector.load %arg15[%c0_48, %c0_49] : memref<32x128xf32, #tpu.memory_space<vmem>>, vector<32x128xf32>
    tpu.vector_store %arg15[%c0_48, %c0_49], %101 {strides = array<i32>} : memref<32x128xf32, #tpu.memory_space<vmem>>, vector<32x128xf32>,
    return
  }
  func.func @transform_0(%arg0: i32) -> (i32, i32) {
    %c0_i32 = arith.constant 0 : i32
    %c0_i32_0 = arith.constant 0 : i32
    return %arg0, %c0_i32 : i32, i32
  }
  func.func @transform_1(%arg0: i32) -> (i32, i32) {
    %c0_i32 = arith.constant 0 : i32
    %c0_i32_0 = arith.constant 0 : i32
    %c0_i32_1 = arith.constant 0 : i32
    return %c0_i32, %c0_i32_0 : i32, i32
  }
  func.func @transform_2(%arg0: i32) -> (i32, i32) {
    %c0_i32 = arith.constant 0 : i32
    %c0_i32_0 = arith.constant 0 : i32
    %c0_i32_1 = arith.constant 0 : i32
    return %c0_i32, %c0_i32_0 : i32, i32
  }
  func.func @transform_3(%arg0: i32) -> (i32, i32) {
    %c0_i32 = arith.constant 0 : i32
    %c0_i32_0 = arith.constant 0 : i32
    %c0_i32_1 = arith.constant 0 : i32
    return %c0_i32, %c0_i32_0 : i32, i32
  }
  func.func @transform_4(%arg0: i32) -> (i32, i32) {
    %c0_i32 = arith.constant 0 : i32
    %c0_i32_0 = arith.constant 0 : i32
    %c0_i32_1 = arith.constant 0 : i32
    return %c0_i32, %c0_i32_0 : i32, i32
  }
  func.func @transform_5(%arg0: i32) -> (i32, i32) {
    %c0_i32 = arith.constant 0 : i32
    %c0_i32_0 = arith.constant 0 : i32
    %c0_i32_1 = arith.constant 0 : i32
    return %c0_i32, %c0_i32_0 : i32, i32
  }
  func.func @transform_6(%arg0: i32) -> (i32, i32) {
    %c0_i32 = arith.constant 0 : i32
    %c0_i32_0 = arith.constant 0 : i32
    %c0_i32_1 = arith.constant 0 : i32
    return %c0_i32, %c0_i32_0 : i32, i32
  }
  func.func @transform_7(%arg0: i32) -> (i32, i32) {
    %c0_i32 = arith.constant 0 : i32
    %c0_i32_0 = arith.constant 0 : i32
    %c0_i32_1 = arith.constant 0 : i32
    return %c0_i32, %c0_i32_0 : i32, i32
  }
  func.func @transform_8(%arg0: i32) -> (i32, i32) {
    %c0_i32 = arith.constant 0 : i32
    %c0_i32_0 = arith.constant 0 : i32
    %c0_i32_1 = arith.constant 0 : i32
    return %c0_i32, %c0_i32_0 : i32, i32
  }
  func.func @transform_9(%arg0: i32) -> (i32, i32) {
    %c0_i32 = arith.constant 0 : i32
    %c0_i32_0 = arith.constant 0 : i32
    %c0_i32_1 = arith.constant 0 : i32
    return %c0_i32, %c0_i32_0 : i32, i32
  }
  func.func @transform_10(%arg0: i32) -> (i32, i32) {
    %c0_i32 = arith.constant 0 : i32
    %c0_i32_0 = arith.constant 0 : i32
    %c0_i32_1 = arith.constant 0 : i32
    return %c0_i32, %c0_i32_0 : i32, i32
  }
  func.func @transform_11(%arg0: i32) -> (i32, i32) {
    %c0_i32 = arith.constant 0 : i32
    %c0_i32_0 = arith.constant 0 : i32
    %c0_i32_1 = arith.constant 0 : i32
    return %c0_i32, %c0_i32_0 : i32, i32
  }
  func.func @transform_12(%arg0: i32) -> (i32, i32) {
    %c0_i32 = arith.constant 0 : i32
    %c0_i32_0 = arith.constant 0 : i32
    %c0_i32_1 = arith.constant 0 : i32
    return %c0_i32, %c0_i32_0 : i32, i32
  }
  func.func @transform_13(%arg0: i32) -> (i32, i32) {
    %c0_i32 = arith.constant 0 : i32
    %c0_i32_0 = arith.constant 0 : i32
    %c0_i32_1 = arith.constant 0 : i32
    return %c0_i32, %c0_i32_0 : i32, i32
  }
  func.func @transform_14(%arg0: i32) -> (i32, i32) {
    %c0_i32 = arith.constant 0 : i32
    %c0_i32_0 = arith.constant 0 : i32
    return %arg0, %c0_i32 : i32, i32
  }
}

</mosaic_0001>

<llo_original>
// kernel: tpu_custom_call.1
$region0: #{tpu_custom_call.1}
  #allocation0 [shape = 'u32[]', space=smem, size = 0x4, offset = 0x4, fixed_abs, tag = 'smem constant byte address 0x4 - core index']
  #allocation1 [shape = 'u32[72,128]{1,0:T(1,128)}', space=vmem, size = 0x9000, scoped, tag = 'internal scratch']
  %s0 = inlined_call_operand.vmem [shape: f32[64,32], index: 0, kind: input, shape index: {}]
  %s1 = inlined_call_operand.vmem [shape: f32[1,32], index: 1, kind: input, shape index: {}]
  %s2 = inlined_call_operand.vmem [shape: f32[1,32], index: 2, kind: input, shape index: {}]
  %s3 = inlined_call_operand.hbm [shape: bf16[32,128], index: 3, kind: input, shape index: {}]
  %s4 = inlined_call_operand.vmem [shape: f32[1,128], index: 4, kind: input, shape index: {}]
  %s5 = inlined_call_operand.vmem [shape: bf16[128,128], index: 5, kind: input, shape index: {}]
  %s6 = inlined_call_operand.hbm [shape: bf16[128,128], index: 6, kind: input, shape index: {}]
  %s7 = inlined_call_operand.vmem [shape: f32[1,128], index: 7, kind: input, shape index: {}]
  %s8 = inlined_call_operand.vmem [shape: f32[1,64], index: 8, kind: input, shape index: {}]
  %s9 = inlined_call_operand.vmem [shape: f32[1,64], index: 9, kind: input, shape index: {}]
  %s10 = inlined_call_operand.vmem [shape: bf16[64,64], index: 10, kind: input, shape index: {}]
  %s11 = inlined_call_operand.vmem [shape: f32[1,64], index: 11, kind: input, shape index: {}]
  %s12 = inlined_call_operand.hbm [shape: bf16[64,128], index: 12, kind: input, shape index: {}]
  %s13 = inlined_call_operand.vmem [shape: f32[1,128], index: 13, kind: input, shape index: {}]
  %s14 = inlined_call_operand.hbm [shape: f32[64,128], index: 14, kind: output, shape index: {}]
  %s15 = sld [smem:[#allocation0]]
  $region101: #{tpu_custom_call.1} parent=0
    _
  %s17 = ssub.s32 1, %s15
  %s18 = scalar_select 0, %s17, %s15
  $region1: #{tpu_custom_call.1} parent=0
    #allocation2 [shape = 'u8[8192]{0}', space=vmem, size = 0x2000, scoped, tag = 'input window, operand 3, single buffered']
    #allocation3 [shape = 's32[2]{0}', space=sflag, size = 0x8, scoped, tag = 'scoped memory for tpu_custom_call.1']
    #allocation4 [shape = 's32[2]{0}', space=sflag, size = 0x8, scoped, tag = 'scoped memory for tpu_custom_call.1']
    #allocation5 [shape = 'u8[32768]{0}', space=vmem, size = 0x8000, scoped, tag = 'input window, operand 6, single buffered']
    #allocation6 [shape = 's32[1]{0}', space=sflag, size = 0x4, scoped, tag = 'scoped memory for tpu_custom_call.1']
    #allocation7 [shape = 'u8[16384]{0}', space=vmem, size = 0x4000, scoped, tag = 'input window, operand 12, single buffered']
    #allocation8 [shape = 'u8[32768]{0}', space=vmem, size = 0x8000, scoped, tag = 'output window, operand 0']
    %19 = vsyncpa [#allocation3], 0
    %20 = vsyncpa [#allocation6], 0
    %21 = vsyncpa [#allocation4], 0
    %s22 = scalar_lea.sflag [#allocation4], 1
    %23 = vsyncpa %s22, 0
    loop: start=0, step=1, limit=4
    $region2: #{tpu_custom_call.1} parent=1 // loop_pre_header
      _
    $region3: #{tpu_custom_call.1} parent=1 // loop_header
      %s25 = sphi 0, %s29
      %p26 = scmp.ge.s32.totalorder %s25, 4
      %s35 = sphi 0, %s37
      %s38 = sphi 0, %s35
      %s39 = sphi 0, %s38
      %s55 = sphi 0, %s39
      %s59 = sphi 0, %s59
      %s61 = sphi 0, %s59
      %s62 = sphi 0, %s61
      %s76 = sphi 0, %s62
      %s80 = sphi 0, %s80
      %s82 = sphi 0, %s80
      %s83 = sphi 0, %s82
      %s97 = sphi 0, %s83
      %s101 = sphi 0, %s101
      %s103 = sphi 0, %s101
      %s104 = sphi 0, %s103
      %s118 = sphi 0, %s104
      %s122 = sphi 0, %s122
      %s124 = sphi 0, %s122
      %s125 = sphi 0, %s124
      %s139 = sphi 0, %s125
      %s143 = sphi 0, %s143
      %s145 = sphi 0, %s143
      %s146 = sphi 0, %s145
      %s160 = sphi 0, %s146
      %s164 = sphi 0, %s164
      %s166 = sphi 0, %s164
      %s167 = sphi 0, %s166
      %s181 = sphi 0, %s167
      %s185 = sphi 0, %s185
      %s187 = sphi 0, %s185
      %s188 = sphi 0, %s187
      %s202 = sphi 0, %s188
      %s206 = sphi 0, %s206
      %s208 = sphi 0, %s206
      %s209 = sphi 0, %s208
      %s223 = sphi 0, %s209
      %s227 = sphi 0, %s227
      %s229 = sphi 0, %s227
      %s230 = sphi 0, %s229
      %s244 = sphi 0, %s230
      %s248 = sphi 0, %s248
      %s250 = sphi 0, %s248
      %s251 = sphi 0, %s250
      %s265 = sphi 0, %s251
      %s269 = sphi 0, %s269
      %s271 = sphi 0, %s269
      %s272 = sphi 0, %s271
      %s286 = sphi 0, %s272
      %s290 = sphi 0, %s290
      %s292 = sphi 0, %s290
      %s293 = sphi 0, %s292
      %s307 = sphi 0, %s293
      %s311 = sphi 0, %s311
      %s313 = sphi 0, %s311
      %s314 = sphi 0, %s313
      %s328 = sphi 0, %s314
      %s334 = sphi 0, %s336
      %s337 = sphi 0, %s334
      %s338 = sphi 0, %s337
      %s354 = sphi 0, %s338
    $region4: #{tpu_custom_call.1} parent=1 // loop_header_branch
      %28 = sbr.rel (%p26) target = $region8
    $region5: #{tpu_custom_call.1} parent=1 // loop_body
      %s30 = ssub.s32 %s25, 1
      %s31 = ssub.s32 %s25, 2
      %s32 = sadd.s32 %s25, 1
      %s33 = ssub.s32 %s25, %s32
      %p34 = scmp.eq.s32.totalorder %s33, 0
      %s36 = sadd.s32 %s35, 1
      %s37 = scalar_select %p34, %s35, %s36
      %p40 = pneg %p34
      %p41 = scmp.eq.s32.totalorder %s25, 1
      %p42 = por %p40, %p41
      %p43 = scmp.ne.s32.totalorder %s35, %s38
      %p44 = scmp.eq.s32.totalorder %s25, 0
      %p45 = por %p43, %p44
      %p46 = scmp.ne.s32.totalorder %s35, %s38
      %p47 = scmp.eq.s32.totalorder %s30, 1
      %p48 = por %p46, %p47
      %p49 = scmp.ne.s32.totalorder %s38, %s39
      %p50 = scmp.eq.s32.totalorder %s30, 0
      %p51 = por %p49, %p50
      %p52 = scmp.ne.s32.totalorder %s38, %s39
      %p53 = scmp.eq.s32.totalorder %s31, 1
      %p54 = por %p52, %p53
      %p56 = scmp.ne.s32.totalorder %s39, %s55
      %p57 = scmp.eq.s32.totalorder %s31, 0
      %p58 = por %p56, %p57
      %s60 = sadd.s32 %s59, 1
      %p63 = scmp.eq.s32.totalorder %s25, 1
      %p64 = scmp.ne.s32.totalorder %s59, %s61
      %p65 = scmp.eq.s32.totalorder %s25, 0
      %p66 = por %p64, %p65
      %p67 = scmp.ne.s32.totalorder %s59, %s61
      %p68 = scmp.eq.s32.totalorder %s30, 1
      %p69 = por %p67, %p68
      %p70 = scmp.ne.s32.totalorder %s61, %s62
      %p71 = scmp.eq.s32.totalorder %s30, 0
      %p72 = por %p70, %p71
      %p73 = scmp.ne.s32.totalorder %s61, %s62
      %p74 = scmp.eq.s32.totalorder %s31, 1
      %p75 = por %p73, %p74
      %p77 = scmp.ne.s32.totalorder %s62, %s76
      %p78 = scmp.eq.s32.totalorder %s31, 0
      %p79 = por %p77, %p78
      %s81 = sadd.s32 %s80, 1
      %p84 = scmp.eq.s32.totalorder %s25, 1
      %p85 = scmp.ne.s32.totalorder %s80, %s82
      %p86 = scmp.eq.s32.totalorder %s25, 0
      %p87 = por %p85, %p86
      %p88 = scmp.ne.s32.totalorder %s80, %s82
      %p89 = scmp.eq.s32.totalorder %s30, 1
      %p90 = por %p88, %p89
      %p91 = scmp.ne.s32.totalorder %s82, %s83
      %p92 = scmp.eq.s32.totalorder %s30, 0
      %p93 = por %p91, %p92
      %p94 = scmp.ne.s32.totalorder %s82, %s83
      %p95 = scmp.eq.s32.totalorder %s31, 1
      %p96 = por %p94, %p95
      %p98 = scmp.ne.s32.totalorder %s83, %s97
      %p99 = scmp.eq.s32.totalorder %s31, 0
      %p100 = por %p98, %p99
      %s102 = sadd.s32 %s101, 1
      %p105 = scmp.eq.s32.totalorder %s25, 1
      %p106 = scmp.ne.s32.totalorder %s101, %s103
      %p107 = scmp.eq.s32.totalorder %s25, 0
      %p108 = por %p106, %p107
      %p109 = scmp.ne.s32.totalorder %s101, %s103
      %p110 = scmp.eq.s32.totalorder %s30, 1
      %p111 = por %p109, %p110
      %p112 = scmp.ne.s32.totalorder %s103, %s104
      %p113 = scmp.eq.s32.totalorder %s30, 0
      %p114 = por %p112, %p113
      %p115 = scmp.ne.s32.totalorder %s103, %s104
      %p116 = scmp.eq.s32.totalorder %s31, 1
      %p117 = por %p115, %p116
      %p119 = scmp.ne.s32.totalorder %s104, %s118
      %p120 = scmp.eq.s32.totalorder %s31, 0
      %p121 = por %p119, %p120
      %s123 = sadd.s32 %s122, 1
      %p126 = scmp.eq.s32.totalorder %s25, 1
      %p127 = scmp.ne.s32.totalorder %s122, %s124
      %p128 = scmp.eq.s32.totalorder %s25, 0
      %p129 = por %p127, %p128
      %p130 = scmp.ne.s32.totalorder %s122, %s124
      %p131 = scmp.eq.s32.totalorder %s30, 1
      %p132 = por %p130, %p131
      %p133 = scmp.ne.s32.totalorder %s124, %s125
      %p134 = scmp.eq.s32.totalorder %s30, 0
      %p135 = por %p133, %p134
      %p136 = scmp.ne.s32.totalorder %s124, %s125
      %p137 = scmp.eq.s32.totalorder %s31, 1
      %p138 = por %p136, %p137
      %p140 = scmp.ne.s32.totalorder %s125, %s139
      %p141 = scmp.eq.s32.totalorder %s31, 0
      %p142 = por %p140, %p141
      %s144 = sadd.s32 %s143, 1
      %p147 = scmp.eq.s32.totalorder %s25, 1
      %p148 = scmp.ne.s32.totalorder %s143, %s145
      %p149 = scmp.eq.s32.totalorder %s25, 0
      %p150 = por %p148, %p149
      %p151 = scmp.ne.s32.totalorder %s143, %s145
      %p152 = scmp.eq.s32.totalorder %s30, 1
      %p153 = por %p151, %p152
      %p154 = scmp.ne.s32.totalorder %s145, %s146
      %p155 = scmp.eq.s32.totalorder %s30, 0
      %p156 = por %p154, %p155
      %p157 = scmp.ne.s32.totalorder %s145, %s146
      %p158 = scmp.eq.s32.totalorder %s31, 1
      %p159 = por %p157, %p158
      %p161 = scmp.ne.s32.totalorder %s146, %s160
      %p162 = scmp.eq.s32.totalorder %s31, 0
      %p163 = por %p161, %p162
      %s165 = sadd.s32 %s164, 1
      %p168 = scmp.eq.s32.totalorder %s25, 1
      %p169 = scmp.ne.s32.totalorder %s164, %s166
      %p170 = scmp.eq.s32.totalorder %s25, 0
      %p171 = por %p169, %p170
      %p172 = scmp.ne.s32.totalorder %s164, %s166
      %p173 = scmp.eq.s32.totalorder %s30, 1
      %p174 = por %p172, %p173
      %p175 = scmp.ne.s32.totalorder %s166, %s167
      %p176 = scmp.eq.s32.totalorder %s30, 0
      %p177 = por %p175, %p176
      %p178 = scmp.ne.s32.totalorder %s166, %s167
      %p179 = scmp.eq.s32.totalorder %s31, 1
      %p180 = por %p178, %p179
      %p182 = scmp.ne.s32.totalorder %s167, %s181
      %p183 = scmp.eq.s32.totalorder %s31, 0
      %p184 = por %p182, %p183
      %s186 = sadd.s32 %s185, 1
      %p189 = scmp.eq.s32.totalorder %s25, 1
      %p190 = scmp.ne.s32.totalorder %s185, %s187
      %p191 = scmp.eq.s32.totalorder %s25, 0
      %p192 = por %p190, %p191
      %p193 = scmp.ne.s32.totalorder %s185, %s187
      %p194 = scmp.eq.s32.totalorder %s30, 1
      %p195 = por %p193, %p194
      %p196 = scmp.ne.s32.totalorder %s187, %s188
      %p197 = scmp.eq.s32.totalorder %s30, 0
      %p198 = por %p196, %p197
      %p199 = scmp.ne.s32.totalorder %s187, %s188
      %p200 = scmp.eq.s32.totalorder %s31, 1
      %p201 = por %p199, %p200
      %p203 = scmp.ne.s32.totalorder %s188, %s202
      %p204 = scmp.eq.s32.totalorder %s31, 0
      %p205 = por %p203, %p204
      %s207 = sadd.s32 %s206, 1
      %p210 = scmp.eq.s32.totalorder %s25, 1
      %p211 = scmp.ne.s32.totalorder %s206, %s208
      %p212 = scmp.eq.s32.totalorder %s25, 0
      %p213 = por %p211, %p212
      %p214 = scmp.ne.s32.totalorder %s206, %s208
      %p215 = scmp.eq.s32.totalorder %s30, 1
      %p216 = por %p214, %p215
      %p217 = scmp.ne.s32.totalorder %s208, %s209
      %p218 = scmp.eq.s32.totalorder %s30, 0
      %p219 = por %p217, %p218
      %p220 = scmp.ne.s32.totalorder %s208, %s209
      %p221 = scmp.eq.s32.totalorder %s31, 1
      %p222 = por %p220, %p221
      %p224 = scmp.ne.s32.totalorder %s209, %s223
      %p225 = scmp.eq.s32.totalorder %s31, 0
      %p226 = por %p224, %p225
      %s228 = sadd.s32 %s227, 1
      %p231 = scmp.eq.s32.totalorder %s25, 1
      %p232 = scmp.ne.s32.totalorder %s227, %s229
      %p233 = scmp.eq.s32.totalorder %s25, 0
      %p234 = por %p232, %p233
      %p235 = scmp.ne.s32.totalorder %s227, %s229
      %p236 = scmp.eq.s32.totalorder %s30, 1
      %p237 = por %p235, %p236
      %p238 = scmp.ne.s32.totalorder %s229, %s230
      %p239 = scmp.eq.s32.totalorder %s30, 0
      %p240 = por %p238, %p239
      %p241 = scmp.ne.s32.totalorder %s229, %s230
      %p242 = scmp.eq.s32.totalorder %s31, 1
      %p243 = por %p241, %p242
      %p245 = scmp.ne.s32.totalorder %s230, %s244
      %p246 = scmp.eq.s32.totalorder %s31, 0
      %p247 = por %p245, %p246
      %s249 = sadd.s32 %s248, 1
      %p252 = scmp.eq.s32.totalorder %s25, 1
      %p253 = scmp.ne.s32.totalorder %s248, %s250
      %p254 = scmp.eq.s32.totalorder %s25, 0
      %p255 = por %p253, %p254
      %p256 = scmp.ne.s32.totalorder %s248, %s250
      %p257 = scmp.eq.s32.totalorder %s30, 1
      %p258 = por %p256, %p257
      %p259 = scmp.ne.s32.totalorder %s250, %s251
      %p260 = scmp.eq.s32.totalorder %s30, 0
      %p261 = por %p259, %p260
      %p262 = scmp.ne.s32.totalorder %s250, %s251
      %p263 = scmp.eq.s32.totalorder %s31, 1
      %p264 = por %p262, %p263
      %p266 = scmp.ne.s32.totalorder %s251, %s265
      %p267 = scmp.eq.s32.totalorder %s31, 0
      %p268 = por %p266, %p267
      %s270 = sadd.s32 %s269, 1
      %p273 = scmp.eq.s32.totalorder %s25, 1
      %p274 = scmp.ne.s32.totalorder %s269, %s271
      %p275 = scmp.eq.s32.totalorder %s25, 0
      %p276 = por %p274, %p275
      %p277 = scmp.ne.s32.totalorder %s269, %s271
      %p278 = scmp.eq.s32.totalorder %s30, 1
      %p279 = por %p277, %p278
      %p280 = scmp.ne.s32.totalorder %s271, %s272
      %p281 = scmp.eq.s32.totalorder %s30, 0
      %p282 = por %p280, %p281
      %p283 = scmp.ne.s32.totalorder %s271, %s272
      %p284 = scmp.eq.s32.totalorder %s31, 1
      %p285 = por %p283, %p284
      %p287 = scmp.ne.s32.totalorder %s272, %s286
      %p288 = scmp.eq.s32.totalorder %s31, 0
      %p289 = por %p287, %p288
      %s291 = sadd.s32 %s290, 1
      %p294 = scmp.eq.s32.totalorder %s25, 1
      %p295 = scmp.ne.s32.totalorder %s290, %s292
      %p296 = scmp.eq.s32.totalorder %s25, 0
      %p297 = por %p295, %p296
      %p298 = scmp.ne.s32.totalorder %s290, %s292
      %p299 = scmp.eq.s32.totalorder %s30, 1
      %p300 = por %p298, %p299
      %p301 = scmp.ne.s32.totalorder %s292, %s293
      %p302 = scmp.eq.s32.totalorder %s30, 0
      %p303 = por %p301, %p302
      %p304 = scmp.ne.s32.totalorder %s292, %s293
      %p305 = scmp.eq.s32.totalorder %s31, 1
      %p306 = por %p304, %p305
      %p308 = scmp.ne.s32.totalorder %s293, %s307
      %p309 = scmp.eq.s32.totalorder %s31, 0
      %p310 = por %p308, %p309
      %s312 = sadd.s32 %s311, 1
      %p315 = scmp.eq.s32.totalorder %s25, 1
      %p316 = scmp.ne.s32.totalorder %s311, %s313
      %p317 = scmp.eq.s32.totalorder %s25, 0
      %p318 = por %p316, %p317
      %p319 = scmp.ne.s32.totalorder %s311, %s313
      %p320 = scmp.eq.s32.totalorder %s30, 1
      %p321 = por %p319, %p320
      %p322 = scmp.ne.s32.totalorder %s313, %s314
      %p323 = scmp.eq.s32.totalorder %s30, 0
      %p324 = por %p322, %p323
      %p325 = scmp.ne.s32.totalorder %s313, %s314
      %p326 = scmp.eq.s32.totalorder %s31, 1
      %p327 = por %p325, %p326
      %p329 = scmp.ne.s32.totalorder %s314, %s328
      %p330 = scmp.eq.s32.totalorder %s31, 0
      %p331 = por %p329, %p330
      %s332 = ssub.s32 %s25, %s32
      %p333 = scmp.eq.s32.totalorder %s332, 0
      %s335 = sadd.s32 %s334, 1
      %s336 = scalar_select %p333, %s334, %s335
      %p339 = pneg %p333
      %p340 = scmp.eq.s32.totalorder %s25, 1
      %p341 = por %p339, %p340
      %p342 = scmp.ne.s32.totalorder %s334, %s337
      %p343 = scmp.eq.s32.totalorder %s25, 0
      %p344 = por %p342, %p343
      %p345 = scmp.ne.s32.totalorder %s334, %s337
      %p346 = scmp.eq.s32.totalorder %s30, 1
      %p347 = por %p345, %p346
      %p348 = scmp.ne.s32.totalorder %s337, %s338
      %p349 = scmp.eq.s32.totalorder %s30, 0
      %p350 = por %p348, %p349
      %p351 = scmp.ne.s32.totalorder %s337, %s338
      %p352 = scmp.eq.s32.totalorder %s31, 1
      %p353 = por %p351, %p352
      %p355 = scmp.ne.s32.totalorder %s338, %s354
      %p356 = scmp.eq.s32.totalorder %s31, 0
      %p357 = por %p355, %p356
      %p358 = scmp.le.s32.totalorder 1, %s25
      %p359 = scmp.lt.s32.totalorder %s25, 3
      %p360 = pnand %p358, %p359
      %p361 = pneg %p360
      // Predicated region
      $region9: #{tpu_custom_call.1} parent=5 // pred_check
        _
      $region10: #{tpu_custom_call.1} parent=5 // pred_check_branch
        %363 = sbr.rel (%p360) target = $region12
      $region11: #{tpu_custom_call.1} parent=5 // pred_region
        %s364 = ssub.s32 %s25, 1
        // Predicated region
        $region13: #{tpu_custom_call.1} parent=11 // pred_check
          %p365 = pneg %p72
        $region14: #{tpu_custom_call.1} parent=11 // pred_check_branch
          %367 = sbr.rel (%p365) target = $region16
        $region15: #{tpu_custom_call.1} parent=11 // pred_region
          _
        $region16: #{tpu_custom_call.1} parent=11 // pred_fallthru
          _
        // Predicated region
        $region17: #{tpu_custom_call.1} parent=11 // pred_check
          %p368 = pneg %p93
        $region18: #{tpu_custom_call.1} parent=11 // pred_check_branch
          %370 = sbr.rel (%p368) target = $region20
        $region19: #{tpu_custom_call.1} parent=11 // pred_region
          _
        $region20: #{tpu_custom_call.1} parent=11 // pred_fallthru
          _
        // Predicated region
        $region21: #{tpu_custom_call.1} parent=11 // pred_check
          %p371 = pneg %p114
        $region22: #{tpu_custom_call.1} parent=11 // pred_check_branch
          %373 = sbr.rel (%p371) target = $region24
        $region23: #{tpu_custom_call.1} parent=11 // pred_region
          %375 = vsyncadd [#allocation3], 0
          %s376 = sshll.u32 %s3, 4
          %s377 = int_to_ptr.hbm [resolvable:$true] %s376
          %s378 = sshll.u32 [#allocation2], 4
          %s379 = int_to_ptr.vmem [resolvable:$true] %s378
          %384 = dma.hbm_to_vmem [thread:$0]  %s377, 256, %s379, [#allocation3], 64, 64, 4
        $region24: #{tpu_custom_call.1} parent=11 // pred_fallthru
          _
        // Predicated region
        $region25: #{tpu_custom_call.1} parent=11 // pred_check
          %p385 = pneg %p135
        $region26: #{tpu_custom_call.1} parent=11 // pred_check_branch
          %387 = sbr.rel (%p385) target = $region28
        $region27: #{tpu_custom_call.1} parent=11 // pred_region
          _
        $region28: #{tpu_custom_call.1} parent=11 // pred_fallthru
          _
        // Predicated region
        $region29: #{tpu_custom_call.1} parent=11 // pred_check
          %p388 = pneg %p156
        $region30: #{tpu_custom_call.1} parent=11 // pred_check_branch
          %390 = sbr.rel (%p388) target = $region32
        $region31: #{tpu_custom_call.1} parent=11 // pred_region
          _
        $region32: #{tpu_custom_call.1} parent=11 // pred_fallthru
          _
        // Predicated region
        $region33: #{tpu_custom_call.1} parent=11 // pred_check
          %p391 = pneg %p177
        $region34: #{tpu_custom_call.1} parent=11 // pred_check_branch
          %393 = sbr.rel (%p391) target = $region36
        $region35: #{tpu_custom_call.1} parent=11 // pred_region
          %395 = vsyncadd [#allocation6], 0
          %s396 = sshll.u32 %s6, 4
          %s397 = int_to_ptr.hbm [resolvable:$true] %s396
          %s398 = sshll.u32 [#allocation5], 4
          %s399 = int_to_ptr.vmem [resolvable:$true] %s398
          %404 = dma.hbm_to_vmem [thread:$0]  %s397, 1024, %s399, [#allocation6], 64, 64, 4
        $region36: #{tpu_custom_call.1} parent=11 // pred_fallthru
          _
        // Predicated region
        $region37: #{tpu_custom_call.1} parent=11 // pred_check
          %p405 = pneg %p198
        $region38: #{tpu_custom_call.1} parent=11 // pred_check_branch
          %407 = sbr.rel (%p405) target = $region40
        $region39: #{tpu_custom_call.1} parent=11 // pred_region
          _
        $region40: #{tpu_custom_call.1} parent=11 // pred_fallthru
          _
        // Predicated region
        $region41: #{tpu_custom_call.1} parent=11 // pred_check
          %p408 = pneg %p219
        $region42: #{tpu_custom_call.1} parent=11 // pred_check_branch
          %410 = sbr.rel (%p408) target = $region44
        $region43: #{tpu_custom_call.1} parent=11 // pred_region
          _
        $region44: #{tpu_custom_call.1} parent=11 // pred_fallthru
          _
        // Predicated region
        $region45: #{tpu_custom_call.1} parent=11 // pred_check
          %p411 = pneg %p240
        $region46: #{tpu_custom_call.1} parent=11 // pred_check_branch
          %413 = sbr.rel (%p411) target = $region48
        $region47: #{tpu_custom_call.1} parent=11 // pred_region
          _
        $region48: #{tpu_custom_call.1} parent=11 // pred_fallthru
          _
        // Predicated region
        $region49: #{tpu_custom_call.1} parent=11 // pred_check
          %p414 = pneg %p261
        $region50: #{tpu_custom_call.1} parent=11 // pred_check_branch
          %416 = sbr.rel (%p414) target = $region52
        $region51: #{tpu_custom_call.1} parent=11 // pred_region
          _
        $region52: #{tpu_custom_call.1} parent=11 // pred_fallthru
          _
        // Predicated region
        $region53: #{tpu_custom_call.1} parent=11 // pred_check
          %p417 = pneg %p282
        $region54: #{tpu_custom_call.1} parent=11 // pred_check_branch
          %419 = sbr.rel (%p417) target = $region56
        $region55: #{tpu_custom_call.1} parent=11 // pred_region
          _
        $region56: #{tpu_custom_call.1} parent=11 // pred_fallthru
          _
        // Predicated region
        $region57: #{tpu_custom_call.1} parent=11 // pred_check
          %p420 = pneg %p303
        $region58: #{tpu_custom_call.1} parent=11 // pred_check_branch
          %422 = sbr.rel (%p420) target = $region60
        $region59: #{tpu_custom_call.1} parent=11 // pred_region
          %424 = vsyncadd [#allocation6], 0
          %s425 = sshll.u32 %s12, 4
          %s426 = int_to_ptr.hbm [resolvable:$true] %s425
          %s427 = sshll.u32 [#allocation7], 4
          %s428 = int_to_ptr.vmem [resolvable:$true] %s427
          %433 = dma.hbm_to_vmem [thread:$0]  %s426, 512, %s428, [#allocation6], 64, 64, 4
        $region60: #{tpu_custom_call.1} parent=11 // pred_fallthru
          _
        // Predicated region
        $region61: #{tpu_custom_call.1} parent=11 // pred_check
          %p434 = pneg %p324
        $region62: #{tpu_custom_call.1} parent=11 // pred_check_branch
          %436 = sbr.rel (%p434) target = $region64
        $region63: #{tpu_custom_call.1} parent=11 // pred_region
          _
        $region64: #{tpu_custom_call.1} parent=11 // pred_fallthru
          _
      $region12: #{tpu_custom_call.1} parent=5 // pred_fallthru
        _
      %p437 = scmp.lt.s32.totalorder %s25, 2
      // Predicated region
      $region65: #{tpu_custom_call.1} parent=5 // pred_check
        %p438 = pneg %p437
      $region66: #{tpu_custom_call.1} parent=5 // pred_check_branch
        %440 = sbr.rel (%p438) target = $region68
      $region67: #{tpu_custom_call.1} parent=5 // pred_region
        // Predicated region
        $region69: #{tpu_custom_call.1} parent=67 // pred_check
          %p441 = pneg %p45
        $region70: #{tpu_custom_call.1} parent=67 // pred_check_branch
          %443 = sbr.rel (%p441) target = $region72
        $region71: #{tpu_custom_call.1} parent=67 // pred_region
          %s444 = smul.u32 4, %s25
          %p445 = scmp.lt.s32.totalorder %s444, 7
          %s446 = scalar_select %p445, %s444, 7
          %s447 = smul.addr %s446, 8
          %s448 = scalar_lea.vmem %s0, %s447
          %s449 = smul.u32 4, %s25
        $region72: #{tpu_custom_call.1} parent=67 // pred_fallthru
          _
      $region68: #{tpu_custom_call.1} parent=5 // pred_fallthru
        _
      %p450 = scmp.le.s32.totalorder 1, %s25
      %p451 = scmp.lt.s32.totalorder %s25, 3
      %p452 = pnand %p450, %p451
      %p453 = pneg %p452
      // Predicated region
      $region73: #{tpu_custom_call.1} parent=5 // pred_check
        _
      $region74: #{tpu_custom_call.1} parent=5 // pred_check_branch
        %455 = sbr.rel (%p452) target = $region76
      $region75: #{tpu_custom_call.1} parent=5 // pred_region
        %s456 = ssub.s32 %s25, 1
        // Predicated region
        $region77: #{tpu_custom_call.1} parent=75 // pred_check
          %p457 = pneg %p114
        $region78: #{tpu_custom_call.1} parent=75 // pred_check_branch
          %459 = sbr.rel (%p457) target = $region80
        $region79: #{tpu_custom_call.1} parent=75 // pred_region
          %461 = dma.done [#allocation3], 256
        $region80: #{tpu_custom_call.1} parent=75 // pred_fallthru
          _
        // Predicated region
        $region81: #{tpu_custom_call.1} parent=75 // pred_check
          %p462 = pneg %p177
        $region82: #{tpu_custom_call.1} parent=75 // pred_check_branch
          %464 = sbr.rel (%p462) target = $region84
        $region83: #{tpu_custom_call.1} parent=75 // pred_region
          %466 = dma.done [#allocation6], 1024
        $region84: #{tpu_custom_call.1} parent=75 // pred_fallthru
          _
        // Predicated region
        $region85: #{tpu_custom_call.1} parent=75 // pred_check
          %p467 = pneg %p303
        $region86: #{tpu_custom_call.1} parent=75 // pred_check_branch
          %469 = sbr.rel (%p467) target = $region88
        $region87: #{tpu_custom_call.1} parent=75 // pred_region
          %471 = dma.done [#allocation6], 512
        $region88: #{tpu_custom_call.1} parent=75 // pred_fallthru
          _
        %s472 = smul.u32 4, %s30
        %p473 = scmp.lt.s32.totalorder %s472, 7
        %s474 = scalar_select %p473, %s472, 7
        %s475 = smul.addr %s474, 8
        %s476 = scalar_lea.vmem %s0, %s475
        %p477 = pneg %p51
        %p478 = pneg %p48
        %p479 = pneg %p72
        %p480 = pneg %p69
        %p481 = pneg %p93
        %p482 = pneg %p90
        %p483 = pneg %p114
        %p484 = pneg %p111
        %p485 = pneg %p135
        %p486 = pneg %p132
        %p487 = pneg %p156
        %p488 = pneg %p153
        %p489 = pneg %p177
        %p490 = pneg %p174
        %p491 = pneg %p198
        %p492 = pneg %p195
        %p493 = pneg %p219
        %p494 = pneg %p216
        %p495 = pneg %p240
        %p496 = pneg %p237
        %p497 = pneg %p261
        %p498 = pneg %p258
        %p499 = pneg %p282
        %p500 = pneg %p279
        %p501 = pneg %p303
        %p502 = pneg %p300
        %p503 = pneg %p324
        %p504 = pneg %p321
        %p505 = pneg %p350
        %p506 = pneg %p347
        %s507 = sand.u32 %s337, 1
        %s508 = scalar_lea.sflag [#allocation4], %s507
        %s509 = sand.u32 %s337, 1
        %s510 = smul.addr %s509, 32
        %s511 = scalar_lea.vmem [#allocation8], %s510
        %s512 = smul.u32 4, %s30
        %p513 = scmp.lt.s32.totalorder %s512, 7
        %s514 = scalar_select %p513, %s512, 7
        %s515 = smul.addr %s514, 8
        %s516 = scalar_lea.vmem %s0, %s515
        %s517 = smul.u32 4, %s30
        %s518 = smul.u32 4, %s30
        %v520 = vld [vmem:[%s516] sm:$0xff]
        %v521 = vld [vmem:[%s516 + $0x8] sm:$0xff]
        %v522 = vld [vmem:[%s516 + $0x10] sm:$0xff]
        %v523 = vld [vmem:[%s516 + $0x18] sm:$0xff]
        %v524 = vld [vmem:[%s1] sm:$0x1]
        %v525 = vld [vmem:[%s2] sm:$0x1]
        %vm526 = vcmask 261120
        %v527 = vsel %vm526, %v520, 0.0
        %528 = vadd.xlane.f32.xlu0 %v527
        %v529 = vpop.xlane.xlu0 %528
        %v530 = vsel %vm526, %v521, 0.0
        %531 = vadd.xlane.f32.xlu0 %v530
        %v532 = vpop.xlane.xlu0 %531
        %v533 = vsel %vm526, %v522, 0.0
        %534 = vadd.xlane.f32.xlu0 %v533
        %v535 = vpop.xlane.xlu0 %534
        %v536 = vsel %vm526, %v523, 0.0
        %537 = vadd.xlane.f32.xlu0 %v536
        %v538 = vpop.xlane.xlu0 %537
        %v539 = vrcp.pop 32.0
        %v540 = vmul.f32 32.0, %v539
        %v541 = vsub.f32 1.0, %v540
        %v542 = vmul.f32 %v539, %v541
        %v543 = vadd.f32 %v539, %v542
        %vm544 = vweird.f32 %v539
        %v545 = vsel %vm544, %v539, %v543
        %v546 = vmul.f32 %v529, %v545
        %v547 = vmul.f32 %v532, %v545
        %v548 = vmul.f32 %v535, %v545
        %v549 = vmul.f32 %v538, %v545
        %v550 = vsub.f32 %v520, %v546
        %v551 = vsub.f32 %v521, %v547
        %v552 = vsub.f32 %v522, %v548
        %v553 = vsub.f32 %v523, %v549
        %v554 = vmul.f32 %v550, %v550
        %v555 = vmul.f32 %v551, %v551
        %v556 = vmul.f32 %v552, %v552
        %v557 = vmul.f32 %v553, %v553
        %v558 = vsel %vm526, %v554, 0.0
        %559 = vadd.xlane.f32.xlu0 %v558
        %v560 = vpop.xlane.xlu0 %559
        %v561 = vsel %vm526, %v555, 0.0
        %562 = vadd.xlane.f32.xlu0 %v561
        %v563 = vpop.xlane.xlu0 %562
        %v564 = vsel %vm526, %v556, 0.0
        %565 = vadd.xlane.f32.xlu0 %v564
        %v566 = vpop.xlane.xlu0 %565
        %v567 = vsel %vm526, %v557, 0.0
        %568 = vadd.xlane.f32.xlu0 %v567
        %v569 = vpop.xlane.xlu0 %568
        %v570 = vmul.f32 %v560, %v545
        %v571 = vmul.f32 %v563, %v545
        %v572 = vmul.f32 %v566, %v545
        %v573 = vmul.f32 %v569, %v545
        %v574 = vadd.f32 %v570, 1e-05
        %v575 = vadd.f32 %v571, 1e-05
        %v576 = vadd.f32 %v572, 1e-05
        %v577 = vadd.f32 %v573, 1e-05
        %v578 = vrsqrt.pop %v574
        %v579 = vmul.f32 %v578, %v574
        %v580 = vmul.f32 %v579, %v578
        %v581 = vmul.f32 0.5, %v580
        %v582 = vsub.f32 1.5, %v581
        %v583 = vmul.f32 %v578, %v582
        %vm584 = vweird.f32 %v574
        %vm585 = vweird.f32 %v578
        %vm586 = vmor %vm584, %vm585
        %v587 = vsel %vm586, %v578, %v583
        %v588 = vrsqrt.pop %v575
        %v589 = vmul.f32 %v588, %v575
        %v590 = vmul.f32 %v589, %v588
        %v591 = vmul.f32 0.5, %v590
        %v592 = vsub.f32 1.5, %v591
        %v593 = vmul.f32 %v588, %v592
        %vm594 = vweird.f32 %v575
        %vm595 = vweird.f32 %v588
        %vm596 = vmor %vm594, %vm595
        %v597 = vsel %vm596, %v588, %v593
        %v598 = vrsqrt.pop %v576
        %v599 = vmul.f32 %v598, %v576
        %v600 = vmul.f32 %v599, %v598
        %v601 = vmul.f32 0.5, %v600
        %v602 = vsub.f32 1.5, %v601
        %v603 = vmul.f32 %v598, %v602
        %vm604 = vweird.f32 %v576
        %vm605 = vweird.f32 %v598
        %vm606 = vmor %vm604, %vm605
        %v607 = vsel %vm606, %v598, %v603
        %v608 = vrsqrt.pop %v577
        %v609 = vmul.f32 %v608, %v577
        %v610 = vmul.f32 %v609, %v608
        %v611 = vmul.f32 0.5, %v610
        %v612 = vsub.f32 1.5, %v611
        %v613 = vmul.f32 %v608, %v612
        %vm614 = vweird.f32 %v577
        %vm615 = vweird.f32 %v608
        %vm616 = vmor %vm614, %vm615
        %v617 = vsel %vm616, %v608, %v613
        %v618 = vmul.f32 %v550, %v587
        %v619 = vmul.f32 %v551, %v597
        %v620 = vmul.f32 %v552, %v607
        %v621 = vmul.f32 %v553, %v617
        %v623 = vperm.slane %v524, 0
        %v625 = vmul.f32 %v618, %v623
        %v626 = vmul.f32 %v619, %v623
        %v627 = vmul.f32 %v620, %v623
        %v628 = vmul.f32 %v621, %v623
        %v630 = vperm.slane %v525, 0
        %v632 = vadd.f32 %v625, %v630
        %v633 = vadd.f32 %v626, %v630
        %v634 = vadd.f32 %v627, %v630
        %v635 = vadd.f32 %v628, %v630
        %v636 = vpack.c.bf16 %v633, %v632
        %v637 = vpack.c.bf16 %v635, %v634
        %v638 = vld [vmem:[#allocation2] sm:$0xf]
        %v639 = vld [vmem:[#allocation2 + $0x4] sm:$0xf]
        %v640 = vld [vmem:[#allocation2 + $0x8] sm:$0xf]
        %v641 = vld [vmem:[#allocation2 + $0xc] sm:$0xf]
        %v642 = vld [vmem:[%s4] sm:$0x1]
        %v644 = vperm.slane %v642, 0
        %v650 = vunpack.c.l.b16 %v638
        %v651 = vunpack.c.l.b16 %v639
        %v652 = vunpack.c.l.b16 %v640
        %v653 = vunpack.c.l.b16 %v641
        %v654 = vpack.c.b16 %v651, %v650
        %v655 = vpack.c.b16 %v653, %v652
        %v659 = vsel %vm526, %v636, 0
        %v662 = vsel %vm526, %v637, 0
        %664 = vmatpush.bf16.msra.mxu0 0
        %665 = vmatpush.bf16.msra.mxu0 0
        %666 = vmatpush.bf16.msra.mxu0 0
        %667 = vmatpush.bf16.msra.mxu0 0
        %668 = vmatpush.bf16.msra.mxu0 0
        %669 = vmatpush.bf16.msra.mxu0 0
        %670 = vmatpush.bf16.msra.mxu0 %v655
        %671 = vmatpush.bf16.msra.mxu0 %v654
        %672 = vmatmul.bf16.gmra.mxu0 %v659
        %v673 = vpop.f32.mrf.mxu0
        %v674 = vadd.f32 %v644, %v673
        %v675 = vpop.f32.mrf.mxu0
        %v676 = vadd.f32 %v644, %v675
        %677 = vmatmul.bf16.gmra.mxu0 %v662
        %v678 = vpop.f32.mrf.mxu0
        %v679 = vadd.f32 %v644, %v678
        %v680 = vpop.f32.mrf.mxu0
        %v681 = vadd.f32 %v644, %v680
        %682 = vdwg.mxu0
        %v683 = vpack.c.bf16 %v676, %v674
        %v684 = vpack.c.bf16 %v681, %v679
        %v685 = vld [vmem:[%s5] sm:$0xf]
        %v686 = vld [vmem:[%s5 + $0x4] sm:$0xf]
        %v687 = vld [vmem:[%s5 + $0x8] sm:$0xf]
        %v688 = vld [vmem:[%s5 + $0xc] sm:$0xf]
        %v689 = vld [vmem:[%s5 + $0x10] sm:$0xf]
        %v690 = vld [vmem:[%s5 + $0x14] sm:$0xf]
        %v691 = vld [vmem:[%s5 + $0x18] sm:$0xf]
        %v692 = vld [vmem:[%s5 + $0x1c] sm:$0xf]
        %v693 = vld [vmem:[%s5 + $0x20] sm:$0xf]
        %v694 = vld [vmem:[%s5 + $0x24] sm:$0xf]
        %v695 = vld [vmem:[%s5 + $0x28] sm:$0xf]
        %v696 = vld [vmem:[%s5 + $0x2c] sm:$0xf]
        %v697 = vld [vmem:[%s5 + $0x30] sm:$0xf]
        %v698 = vld [vmem:[%s5 + $0x34] sm:$0xf]
        %v699 = vld [vmem:[%s5 + $0x38] sm:$0xf]
        %v700 = vld [vmem:[%s5 + $0x3c] sm:$0xf]
        %v717 = vunpack.c.l.b16 %v685
        %v718 = vunpack.c.l.b16 %v686
        %v719 = vunpack.c.l.b16 %v687
        %v720 = vunpack.c.l.b16 %v688
        %v721 = vunpack.c.l.b16 %v689
        %v722 = vunpack.c.l.b16 %v690
        %v723 = vunpack.c.l.b16 %v691
        %v724 = vunpack.c.l.b16 %v692
        %v725 = vunpack.c.l.b16 %v693
        %v726 = vunpack.c.l.b16 %v694
        %v727 = vunpack.c.l.b16 %v695
        %v728 = vunpack.c.l.b16 %v696
        %v729 = vunpack.c.l.b16 %v697
        %v730 = vunpack.c.l.b16 %v698
        %v731 = vunpack.c.l.b16 %v699
        %v732 = vunpack.c.l.b16 %v700
        %v733 = vpack.c.b16 %v718, %v717
        %v734 = vpack.c.b16 %v720, %v719
        %v735 = vpack.c.b16 %v722, %v721
        %v736 = vpack.c.b16 %v724, %v723
        %v737 = vpack.c.b16 %v726, %v725
        %v738 = vpack.c.b16 %v728, %v727
        %v739 = vpack.c.b16 %v730, %v729
        %v740 = vpack.c.b16 %v732, %v731
        %749 = vmatpush.bf16.msra.mxu0 %v740
        %750 = vmatpush.bf16.msra.mxu0 %v739
        %751 = vmatpush.bf16.msra.mxu0 %v738
        %752 = vmatpush.bf16.msra.mxu0 %v737
        %753 = vmatpush.bf16.msra.mxu0 %v736
        %754 = vmatpush.bf16.msra.mxu0 %v735
        %755 = vmatpush.bf16.msra.mxu0 %v734
        %756 = vmatpush.bf16.msra.mxu0 %v733
        %757 = vmatmul.bf16.gmra.mxu0 %v683
        %v758 = vpop.f32.mrf.mxu0
        %v759 = vadd.f32 0.0, %v758
        %v760 = vpop.f32.mrf.mxu0
        %v761 = vadd.f32 0.0, %v760
        %762 = vmatmul.bf16.gmra.mxu0 %v684
        %v763 = vpop.f32.mrf.mxu0
        %v764 = vadd.f32 0.0, %v763
        %v765 = vpop.f32.mrf.mxu0
        %v766 = vadd.f32 0.0, %v765
        %767 = vdwg.mxu0
        %v768 = vmax.f32 %v759, %v761
        %v769 = vrot.slane %v768, 4
        %v770 = vmax.f32 %v768, %v769
        %v771 = vrot.slane %v770, 2
        %v772 = vmax.f32 %v770, %v771
        %v773 = vrot.slane %v772, 1
        %v774 = vmax.f32 %v772, %v773
        %v775 = vmax.f32 %v764, %v766
        %v776 = vrot.slane %v775, 4
        %v777 = vmax.f32 %v775, %v776
        %v778 = vrot.slane %v777, 2
        %v779 = vmax.f32 %v777, %v778
        %v780 = vrot.slane %v779, 1
        %v781 = vmax.f32 %v779, %v780
        %v782 = vsub.f32 %v759, %v774
        %v783 = vsub.f32 %v761, %v774
        %v784 = vsub.f32 %v764, %v781
        %v785 = vsub.f32 %v766, %v781
        %v786 = vmul.f32 %v782, 1.442695
        %v787 = vpow.pop %v786
        %v788 = vmul.f32 %v783, 1.442695
        %v789 = vpow.pop %v788
        %v790 = vmul.f32 %v784, 1.442695
        %v791 = vpow.pop %v790
        %v792 = vmul.f32 %v785, 1.442695
        %v793 = vpow.pop %v792
        %v794 = vadd.f32 %v787, %v789
        %v795 = vrot.slane %v794, 4
        %v796 = vadd.f32 %v794, %v795
        %v797 = vrot.slane %v796, 2
        %v798 = vadd.f32 %v796, %v797
        %v799 = vrot.slane %v798, 1
        %v800 = vadd.f32 %v798, %v799
        %v801 = vadd.f32 %v791, %v793
        %v802 = vrot.slane %v801, 4
        %v803 = vadd.f32 %v801, %v802
        %v804 = vrot.slane %v803, 2
        %v805 = vadd.f32 %v803, %v804
        %v806 = vrot.slane %v805, 1
        %v807 = vadd.f32 %v805, %v806
        %v808 = vrcp.pop %v800
        %v809 = vrcp.pop %v807
        %v810 = vmul.f32 %v787, %v808
        %v811 = vmul.f32 %v789, %v808
        %v812 = vmul.f32 %v791, %v809
        %v813 = vmul.f32 %v793, %v809
        %814 = vadd.xlane.f32.xlu0 %v810
        %v815 = vpop.xlane.xlu0 %814
        %816 = vadd.xlane.f32.xlu0 %v811
        %v817 = vpop.xlane.xlu0 %816
        %818 = vadd.xlane.f32.xlu0 %v812
        %v819 = vpop.xlane.xlu0 %818
        %820 = vadd.xlane.f32.xlu0 %v813
        %v821 = vpop.xlane.xlu0 %820
        %v822 = vadd.f32 %v815, 1e-09
        %v823 = vadd.f32 %v817, 1e-09
        %v824 = vadd.f32 %v819, 1e-09
        %v825 = vadd.f32 %v821, 1e-09
        %v826 = vrcp.pop %v822
        %v827 = vrcp.pop %v823
        %v828 = vrcp.pop %v824
        %v829 = vrcp.pop %v825
        %v830 = vmul.f32 %v810, %v826
        %v831 = vmul.f32 %v811, %v827
        %v832 = vmul.f32 %v812, %v828
        %v833 = vmul.f32 %v813, %v829
        %v834 = vpack.c.bf16 %v831, %v830
        %v835 = vpack.c.bf16 %v833, %v832
        %v836 = vld [vmem:[#allocation5] sm:$0xf]
        %v837 = vld [vmem:[#allocation5 + $0x4] sm:$0xf]
        %v838 = vld [vmem:[#allocation5 + $0x8] sm:$0xf]
        %v839 = vld [vmem:[#allocation5 + $0xc] sm:$0xf]
        %v840 = vld [vmem:[#allocation5 + $0x10] sm:$0xf]
        %v841 = vld [vmem:[#allocation5 + $0x14] sm:$0xf]
        %v842 = vld [vmem:[#allocation5 + $0x18] sm:$0xf]
        %v843 = vld [vmem:[#allocation5 + $0x1c] sm:$0xf]
        %v844 = vld [vmem:[#allocation5 + $0x20] sm:$0xf]
        %v845 = vld [vmem:[#allocation5 + $0x24] sm:$0xf]
        %v846 = vld [vmem:[#allocation5 + $0x28] sm:$0xf]
        %v847 = vld [vmem:[#allocation5 + $0x2c] sm:$0xf]
        %v848 = vld [vmem:[#allocation5 + $0x30] sm:$0xf]
        %v849 = vld [vmem:[#allocation5 + $0x34] sm:$0xf]
        %v850 = vld [vmem:[#allocation5 + $0x38] sm:$0xf]
        %v851 = vld [vmem:[#allocation5 + $0x3c] sm:$0xf]
        %v852 = vld [vmem:[%s7] sm:$0x1]
        %v854 = vperm.slane %v852, 0
        %v872 = vunpack.c.l.b16 %v836
        %v873 = vunpack.c.l.b16 %v837
        %v874 = vunpack.c.l.b16 %v838
        %v875 = vunpack.c.l.b16 %v839
        %v876 = vunpack.c.l.b16 %v840
        %v877 = vunpack.c.l.b16 %v841
        %v878 = vunpack.c.l.b16 %v842
        %v879 = vunpack.c.l.b16 %v843
        %v880 = vunpack.c.l.b16 %v844
        %v881 = vunpack.c.l.b16 %v845
        %v882 = vunpack.c.l.b16 %v846
        %v883 = vunpack.c.l.b16 %v847
        %v884 = vunpack.c.l.b16 %v848
        %v885 = vunpack.c.l.b16 %v849
        %v886 = vunpack.c.l.b16 %v850
        %v887 = vunpack.c.l.b16 %v851
        %v888 = vpack.c.b16 %v873, %v872
        %v889 = vpack.c.b16 %v875, %v874
        %v890 = vpack.c.b16 %v877, %v876
        %v891 = vpack.c.b16 %v879, %v878
        %v892 = vpack.c.b16 %v881, %v880
        %v893 = vpack.c.b16 %v883, %v882
        %v894 = vpack.c.b16 %v885, %v884
        %v895 = vpack.c.b16 %v887, %v886
        %904 = vmatpush.bf16.msra.mxu0 %v895
        %905 = vmatpush.bf16.msra.mxu0 %v894
        %906 = vmatpush.bf16.msra.mxu0 %v893
        %907 = vmatpush.bf16.msra.mxu0 %v892
        %908 = vmatpush.bf16.msra.mxu0 %v891
        %909 = vmatpush.bf16.msra.mxu0 %v890
        %910 = vmatpush.bf16.msra.mxu0 %v889
        %911 = vmatpush.bf16.msra.mxu0 %v888
        %912 = vmatmul.bf16.gmra.mxu0 %v834
        %v913 = vpop.f32.mrf.mxu0
        %v914 = vadd.f32 %v854, %v913
        %v915 = vpop.f32.mrf.mxu0
        %v916 = vadd.f32 %v854, %v915
        %917 = vmatmul.bf16.gmra.mxu0 %v835
        %v918 = vpop.f32.mrf.mxu0
        %v919 = vadd.f32 %v854, %v918
        %v920 = vpop.f32.mrf.mxu0
        %v921 = vadd.f32 %v854, %v920
        %922 = vdwg.mxu0
        %v923 = vadd.f32 %v674, %v914
        %v924 = vadd.f32 %v676, %v916
        %v925 = vadd.f32 %v679, %v919
        %v926 = vadd.f32 %v681, %v921
        %v927 = vld [vmem:[%s8] sm:$0x1]
        %v928 = vld [vmem:[%s9] sm:$0x1]
        %vm929 = vcmask 523264
        %v930 = vsel %vm929, %v923, 0.0
        %931 = vadd.xlane.f32.xlu0 %v930
        %v932 = vpop.xlane.xlu0 %931
        %v933 = vsel %vm929, %v924, 0.0
        %934 = vadd.xlane.f32.xlu0 %v933
        %v935 = vpop.xlane.xlu0 %934
        %v936 = vsel %vm929, %v925, 0.0
        %937 = vadd.xlane.f32.xlu0 %v936
        %v938 = vpop.xlane.xlu0 %937
        %v939 = vsel %vm929, %v926, 0.0
        %940 = vadd.xlane.f32.xlu0 %v939
        %v941 = vpop.xlane.xlu0 %940
        %v942 = vrcp.pop 64.0
        %v943 = vmul.f32 64.0, %v942
        %v944 = vsub.f32 1.0, %v943
        %v945 = vmul.f32 %v942, %v944
        %v946 = vadd.f32 %v942, %v945
        %vm947 = vweird.f32 %v942
        %v948 = vsel %vm947, %v942, %v946
        %v949 = vmul.f32 %v932, %v948
        %v950 = vmul.f32 %v935, %v948
        %v951 = vmul.f32 %v938, %v948
        %v952 = vmul.f32 %v941, %v948
        %v953 = vsub.f32 %v923, %v949
        %v954 = vsub.f32 %v924, %v950
        %v955 = vsub.f32 %v925, %v951
        %v956 = vsub.f32 %v926, %v952
        %v957 = vmul.f32 %v953, %v953
        %v958 = vmul.f32 %v954, %v954
        %v959 = vmul.f32 %v955, %v955
        %v960 = vmul.f32 %v956, %v956
        %v961 = vsel %vm929, %v957, 0.0
        %962 = vadd.xlane.f32.xlu0 %v961
        %v963 = vpop.xlane.xlu0 %962
        %v964 = vsel %vm929, %v958, 0.0
        %965 = vadd.xlane.f32.xlu0 %v964
        %v966 = vpop.xlane.xlu0 %965
        %v967 = vsel %vm929, %v959, 0.0
        %968 = vadd.xlane.f32.xlu0 %v967
        %v969 = vpop.xlane.xlu0 %968
        %v970 = vsel %vm929, %v960, 0.0
        %971 = vadd.xlane.f32.xlu0 %v970
        %v972 = vpop.xlane.xlu0 %971
        %v973 = vmul.f32 %v963, %v948
        %v974 = vmul.f32 %v966, %v948
        %v975 = vmul.f32 %v969, %v948
        %v976 = vmul.f32 %v972, %v948
        %v977 = vadd.f32 %v973, 1e-05
        %v978 = vadd.f32 %v974, 1e-05
        %v979 = vadd.f32 %v975, 1e-05
        %v980 = vadd.f32 %v976, 1e-05
        %v981 = vrsqrt.pop %v977
        %v982 = vmul.f32 %v981, %v977
        %v983 = vmul.f32 %v982, %v981
        %v984 = vmul.f32 0.5, %v983
        %v985 = vsub.f32 1.5, %v984
        %v986 = vmul.f32 %v981, %v985
        %vm987 = vweird.f32 %v977
        %vm988 = vweird.f32 %v981
        %vm989 = vmor %vm987, %vm988
        %v990 = vsel %vm989, %v981, %v986
        %v991 = vrsqrt.pop %v978
        %v992 = vmul.f32 %v991, %v978
        %v993 = vmul.f32 %v992, %v991
        %v994 = vmul.f32 0.5, %v993
        %v995 = vsub.f32 1.5, %v994
        %v996 = vmul.f32 %v991, %v995
        %vm997 = vweird.f32 %v978
        %vm998 = vweird.f32 %v991
        %vm999 = vmor %vm997, %vm998
        %v1000 = vsel %vm999, %v991, %v996
        %v1001 = vrsqrt.pop %v979
        %v1002 = vmul.f32 %v1001, %v979
        %v1003 = vmul.f32 %v1002, %v1001
        %v1004 = vmul.f32 0.5, %v1003
        %v1005 = vsub.f32 1.5, %v1004
        %v1006 = vmul.f32 %v1001, %v1005
        %vm1007 = vweird.f32 %v979
        %vm1008 = vweird.f32 %v1001
        %vm1009 = vmor %vm1007, %vm1008
        %v1010 = vsel %vm1009, %v1001, %v1006
        %v1011 = vrsqrt.pop %v980
        %v1012 = vmul.f32 %v1011, %v980
        %v1013 = vmul.f32 %v1012, %v1011
        %v1014 = vmul.f32 0.5, %v1013
        %v1015 = vsub.f32 1.5, %v1014
        %v1016 = vmul.f32 %v1011, %v1015
        %vm1017 = vweird.f32 %v980
        %vm1018 = vweird.f32 %v1011
        %vm1019 = vmor %vm1017, %vm1018
        %v1020 = vsel %vm1019, %v1011, %v1016
        %v1021 = vmul.f32 %v953, %v990
        %v1022 = vmul.f32 %v954, %v1000
        %v1023 = vmul.f32 %v955, %v1010
        %v1024 = vmul.f32 %v956, %v1020
        %v1026 = vperm.slane %v927, 0
        %v1028 = vmul.f32 %v1021, %v1026
        %v1029 = vmul.f32 %v1022, %v1026
        %v1030 = vmul.f32 %v1023, %v1026
        %v1031 = vmul.f32 %v1024, %v1026
        %v1033 = vperm.slane %v928, 0
        %v1035 = vadd.f32 %v1028, %v1033
        %v1036 = vadd.f32 %v1029, %v1033
        %v1037 = vadd.f32 %v1030, %v1033
        %v1038 = vadd.f32 %v1031, %v1033
        %v1039 = vpack.c.bf16 %v1036, %v1035
        %v1040 = vpack.c.bf16 %v1038, %v1037
        %v1041 = vld [vmem:[%s10] sm:$0xf]
        %v1042 = vld [vmem:[%s10 + $0x4] sm:$0xf]
        %v1043 = vld [vmem:[%s10 + $0x8] sm:$0xf]
        %v1044 = vld [vmem:[%s10 + $0xc] sm:$0xf]
        %v1045 = vld [vmem:[%s10 + $0x10] sm:$0xf]
        %v1046 = vld [vmem:[%s10 + $0x14] sm:$0xf]
        %v1047 = vld [vmem:[%s10 + $0x18] sm:$0xf]
        %v1048 = vld [vmem:[%s10 + $0x1c] sm:$0xf]
        %v1049 = vld [vmem:[%s11] sm:$0x1]
        %v1051 = vperm.slane %v1049, 0
        %v1061 = vunpack.c.l.b16 %v1041
        %v1062 = vunpack.c.l.b16 %v1042
        %v1063 = vunpack.c.l.b16 %v1043
        %v1064 = vunpack.c.l.b16 %v1044
        %v1065 = vunpack.c.l.b16 %v1045
        %v1066 = vunpack.c.l.b16 %v1046
        %v1067 = vunpack.c.l.b16 %v1047
        %v1068 = vunpack.c.l.b16 %v1048
        %v1069 = vpack.c.b16 %v1062, %v1061
        %v1070 = vpack.c.b16 %v1064, %v1063
        %v1071 = vpack.c.b16 %v1066, %v1065
        %v1072 = vpack.c.b16 %v1068, %v1067
        %v1078 = vsel %vm929, %v1039, 0
        %v1081 = vsel %vm929, %v1040, 0
        %1083 = vmatpush.bf16.msra.mxu0 0
        %1084 = vmatpush.bf16.msra.mxu0 0
        %1085 = vmatpush.bf16.msra.mxu0 0
        %1086 = vmatpush.bf16.msra.mxu0 0
        %1087 = vmatpush.bf16.msra.mxu0 %v1072
        %1088 = vmatpush.bf16.msra.mxu0 %v1071
        %1089 = vmatpush.bf16.msra.mxu0 %v1070
        %1090 = vmatpush.bf16.msra.mxu0 %v1069
        %1091 = vmatmul.bf16.gmra.mxu0 %v1078
        %v1092 = vpop.f32.mrf.mxu0
        %v1093 = vadd.f32 %v1051, %v1092
        %v1094 = vpop.f32.mrf.mxu0
        %v1095 = vadd.f32 %v1051, %v1094
        %1096 = vmatmul.bf16.gmra.mxu0 %v1081
        %v1097 = vpop.f32.mrf.mxu0
        %v1098 = vadd.f32 %v1051, %v1097
        %v1099 = vpop.f32.mrf.mxu0
        %v1100 = vadd.f32 %v1051, %v1099
        %1101 = vdwg.mxu0
        %v1102 = vmul.f32 %v1093, 0.5
        %v1103 = vmul.f32 %v1095, 0.5
        %v1104 = vmul.f32 %v1098, 0.5
        %v1105 = vmul.f32 %v1100, 0.5
        %v1106 = vmul.f32 %v1093, 0.70710677
        %v1107 = vmul.f32 %v1095, 0.70710677
        %v1108 = vmul.f32 %v1098, 0.70710677
        %v1109 = vmul.f32 %v1100, 0.70710677
        %v1110 = vmul.f32 %v1106, %v1106
        %v1111 = vmin.f32 16.0, %v1110
        %v1112 = vmul.f32 %v1111, 2.1237322e-06
        %v1113 = vadd.f32 %v1112, 0.00028619796
        %v1114 = vmul.f32 %v1111, %v1113
        %v1115 = vadd.f32 %v1114, 0.0036580483
        %v1116 = vmul.f32 %v1111, %v1115
        %v1117 = vadd.f32 %v1116, 0.05243302
        %v1118 = vmul.f32 %v1111, %v1117
        %v1119 = vadd.f32 %v1118, 0.18741608
        %v1120 = vmul.f32 %v1111, %v1119
        %v1121 = vadd.f32 %v1120, 1.1283791
        %v1122 = vmul.f32 %v1106, %v1121
        %v1123 = vmul.f32 %v1111, 3.8918573e-05
        %v1124 = vadd.f32 %v1123, 0.001143296
        %v1125 = vmul.f32 %v1111, %v1124
        %v1126 = vadd.f32 %v1125, 0.014752088
        %v1127 = vmul.f32 %v1111, %v1126
        %v1128 = vadd.f32 %v1127, 0.112945676
        %v1129 = vmul.f32 %v1111, %v1128
        %v1130 = vadd.f32 %v1129, 0.4994258
        %v1131 = vmul.f32 %v1111, %v1130
        %v1132 = vadd.f32 %v1131, 1.0
        %v1133 = vrcp.pop %v1132
        %v1134 = vmul.f32 %v1132, %v1133
        %v1135 = vsub.f32 1.0, %v1134
        %v1136 = vmul.f32 %v1133, %v1135
        %v1137 = vadd.f32 %v1133, %v1136
        %vm1138 = vweird.f32 %v1132
        %vm1139 = vweird.f32 %v1133
        %vm1140 = vmor %vm1138, %vm1139
        %v1141 = vsel %vm1140, %v1133, %v1137
        %v1142 = vand.u32 2147483647, %v1132
        %vm1143 = vcmp.eq.f32.partialorder %v1142, 8.507059e+37
        %v1144 = vand.u32 %v1132, 2147483648
        %v1145 = vor.u32 1.1754944e-38, %v1144
        %v1146 = vsel %vm1143, %v1145, %v1141
        %v1147 = vmul.f32 %v1122, %v1146
        %v1148 = vmin.f32 %v1147, 1.0
        %v1149 = vmax.f32 %v1148, -1.0
        %v1150 = vmul.f32 %v1107, %v1107
        %v1151 = vmin.f32 16.0, %v1150
        %v1152 = vmul.f32 %v1151, 2.1237322e-06
        %v1153 = vadd.f32 %v1152, 0.00028619796
        %v1154 = vmul.f32 %v1151, %v1153
        %v1155 = vadd.f32 %v1154, 0.0036580483
        %v1156 = vmul.f32 %v1151, %v1155
        %v1157 = vadd.f32 %v1156, 0.05243302
        %v1158 = vmul.f32 %v1151, %v1157
        %v1159 = vadd.f32 %v1158, 0.18741608
        %v1160 = vmul.f32 %v1151, %v1159
        %v1161 = vadd.f32 %v1160, 1.1283791
        %v1162 = vmul.f32 %v1107, %v1161
        %v1163 = vmul.f32 %v1151, 3.8918573e-05
        %v1164 = vadd.f32 %v1163, 0.001143296
        %v1165 = vmul.f32 %v1151, %v1164
        %v1166 = vadd.f32 %v1165, 0.014752088
        %v1167 = vmul.f32 %v1151, %v1166
        %v1168 = vadd.f32 %v1167, 0.112945676
        %v1169 = vmul.f32 %v1151, %v1168
        %v1170 = vadd.f32 %v1169, 0.4994258
        %v1171 = vmul.f32 %v1151, %v1170
        %v1172 = vadd.f32 %v1171, 1.0
        %v1173 = vrcp.pop %v1172
        %v1174 = vmul.f32 %v1172, %v1173
        %v1175 = vsub.f32 1.0, %v1174
        %v1176 = vmul.f32 %v1173, %v1175
        %v1177 = vadd.f32 %v1173, %v1176
        %vm1178 = vweird.f32 %v1172
        %vm1179 = vweird.f32 %v1173
        %vm1180 = vmor %vm1178, %vm1179
        %v1181 = vsel %vm1180, %v1173, %v1177
        %v1182 = vand.u32 2147483647, %v1172
        %vm1183 = vcmp.eq.f32.partialorder %v1182, 8.507059e+37
        %v1184 = vand.u32 %v1172, 2147483648
        %v1185 = vor.u32 1.1754944e-38, %v1184
        %v1186 = vsel %vm1183, %v1185, %v1181
        %v1187 = vmul.f32 %v1162, %v1186
        %v1188 = vmin.f32 %v1187, 1.0
        %v1189 = vmax.f32 %v1188, -1.0
        %v1190 = vmul.f32 %v1108, %v1108
        %v1191 = vmin.f32 16.0, %v1190
        %v1192 = vmul.f32 %v1191, 2.1237322e-06
        %v1193 = vadd.f32 %v1192, 0.00028619796
        %v1194 = vmul.f32 %v1191, %v1193
        %v1195 = vadd.f32 %v1194, 0.0036580483
        %v1196 = vmul.f32 %v1191, %v1195
        %v1197 = vadd.f32 %v1196, 0.05243302
        %v1198 = vmul.f32 %v1191, %v1197
        %v1199 = vadd.f32 %v1198, 0.18741608
        %v1200 = vmul.f32 %v1191, %v1199
        %v1201 = vadd.f32 %v1200, 1.1283791
        %v1202 = vmul.f32 %v1108, %v1201
        %v1203 = vmul.f32 %v1191, 3.8918573e-05
        %v1204 = vadd.f32 %v1203, 0.001143296
        %v1205 = vmul.f32 %v1191, %v1204
        %v1206 = vadd.f32 %v1205, 0.014752088
        %v1207 = vmul.f32 %v1191, %v1206
        %v1208 = vadd.f32 %v1207, 0.112945676
        %v1209 = vmul.f32 %v1191, %v1208
        %v1210 = vadd.f32 %v1209, 0.4994258
        %v1211 = vmul.f32 %v1191, %v1210
        %v1212 = vadd.f32 %v1211, 1.0
        %v1213 = vrcp.pop %v1212
        %v1214 = vmul.f32 %v1212, %v1213
        %v1215 = vsub.f32 1.0, %v1214
        %v1216 = vmul.f32 %v1213, %v1215
        %v1217 = vadd.f32 %v1213, %v1216
        %vm1218 = vweird.f32 %v1212
        %vm1219 = vweird.f32 %v1213
        %vm1220 = vmor %vm1218, %vm1219
        %v1221 = vsel %vm1220, %v1213, %v1217
        %v1222 = vand.u32 2147483647, %v1212
        %vm1223 = vcmp.eq.f32.partialorder %v1222, 8.507059e+37
        %v1224 = vand.u32 %v1212, 2147483648
        %v1225 = vor.u32 1.1754944e-38, %v1224
        %v1226 = vsel %vm1223, %v1225, %v1221
        %v1227 = vmul.f32 %v1202, %v1226
        %v1228 = vmin.f32 %v1227, 1.0
        %v1229 = vmax.f32 %v1228, -1.0
        %v1230 = vmul.f32 %v1109, %v1109
        %v1231 = vmin.f32 16.0, %v1230
        %v1232 = vmul.f32 %v1231, 2.1237322e-06
        %v1233 = vadd.f32 %v1232, 0.00028619796
        %v1234 = vmul.f32 %v1231, %v1233
        %v1235 = vadd.f32 %v1234, 0.0036580483
        %v1236 = vmul.f32 %v1231, %v1235
        %v1237 = vadd.f32 %v1236, 0.05243302
        %v1238 = vmul.f32 %v1231, %v1237
        %v1239 = vadd.f32 %v1238, 0.18741608
        %v1240 = vmul.f32 %v1231, %v1239
        %v1241 = vadd.f32 %v1240, 1.1283791
        %v1242 = vmul.f32 %v1109, %v1241
        %v1243 = vmul.f32 %v1231, 3.8918573e-05
        %v1244 = vadd.f32 %v1243, 0.001143296
        %v1245 = vmul.f32 %v1231, %v1244
        %v1246 = vadd.f32 %v1245, 0.014752088
        %v1247 = vmul.f32 %v1231, %v1246
        %v1248 = vadd.f32 %v1247, 0.112945676
        %v1249 = vmul.f32 %v1231, %v1248
        %v1250 = vadd.f32 %v1249, 0.4994258
        %v1251 = vmul.f32 %v1231, %v1250
        %v1252 = vadd.f32 %v1251, 1.0
        %v1253 = vrcp.pop %v1252
        %v1254 = vmul.f32 %v1252, %v1253
        %v1255 = vsub.f32 1.0, %v1254
        %v1256 = vmul.f32 %v1253, %v1255
        %v1257 = vadd.f32 %v1253, %v1256
        %vm1258 = vweird.f32 %v1252
        %vm1259 = vweird.f32 %v1253
        %vm1260 = vmor %vm1258, %vm1259
        %v1261 = vsel %vm1260, %v1253, %v1257
        %v1262 = vand.u32 2147483647, %v1252
        %vm1263 = vcmp.eq.f32.partialorder %v1262, 8.507059e+37
        %v1264 = vand.u32 %v1252, 2147483648
        %v1265 = vor.u32 1.1754944e-38, %v1264
        %v1266 = vsel %vm1263, %v1265, %v1261
        %v1267 = vmul.f32 %v1242, %v1266
        %v1268 = vmin.f32 %v1267, 1.0
        %v1269 = vmax.f32 %v1268, -1.0
        %v1270 = vadd.f32 %v1149, 1.0
        %v1271 = vadd.f32 %v1189, 1.0
        %v1272 = vadd.f32 %v1229, 1.0
        %v1273 = vadd.f32 %v1269, 1.0
        %v1274 = vmul.f32 %v1102, %v1270
        %v1275 = vmul.f32 %v1103, %v1271
        %v1276 = vmul.f32 %v1104, %v1272
        %v1277 = vmul.f32 %v1105, %v1273
        %v1278 = vpack.c.bf16 %v1275, %v1274
        %v1279 = vpack.c.bf16 %v1277, %v1276
        %v1280 = vld [vmem:[#allocation7] sm:$0xf]
        %v1281 = vld [vmem:[#allocation7 + $0x4] sm:$0xf]
        %v1282 = vld [vmem:[#allocation7 + $0x8] sm:$0xf]
        %v1283 = vld [vmem:[#allocation7 + $0xc] sm:$0xf]
        %v1284 = vld [vmem:[#allocation7 + $0x10] sm:$0xf]
        %v1285 = vld [vmem:[#allocation7 + $0x14] sm:$0xf]
        %v1286 = vld [vmem:[#allocation7 + $0x18] sm:$0xf]
        %v1287 = vld [vmem:[#allocation7 + $0x1c] sm:$0xf]
        %v1288 = vld [vmem:[%s13] sm:$0x1]
        %v1290 = vperm.slane %v1288, 0
        %v1300 = vunpack.c.l.b16 %v1280
        %v1301 = vunpack.c.l.b16 %v1281
        %v1302 = vunpack.c.l.b16 %v1282
        %v1303 = vunpack.c.l.b16 %v1283
        %v1304 = vunpack.c.l.b16 %v1284
        %v1305 = vunpack.c.l.b16 %v1285
        %v1306 = vunpack.c.l.b16 %v1286
        %v1307 = vunpack.c.l.b16 %v1287
        %v1308 = vpack.c.b16 %v1301, %v1300
        %v1309 = vpack.c.b16 %v1303, %v1302
        %v1310 = vpack.c.b16 %v1305, %v1304
        %v1311 = vpack.c.b16 %v1307, %v1306
        %v1317 = vsel %vm929, %v1278, 0
        %v1320 = vsel %vm929, %v1279, 0
        %1322 = vmatpush.bf16.msra.mxu0 0
        %1323 = vmatpush.bf16.msra.mxu0 0
        %1324 = vmatpush.bf16.msra.mxu0 0
        %1325 = vmatpush.bf16.msra.mxu0 0
        %1326 = vmatpush.bf16.msra.mxu0 %v1311
        %1327 = vmatpush.bf16.msra.mxu0 %v1310
        %1328 = vmatpush.bf16.msra.mxu0 %v1309
        %1329 = vmatpush.bf16.msra.mxu0 %v1308
        %1330 = vmatmul.bf16.gmra.mxu0 %v1317
        %v1331 = vpop.f32.mrf.mxu0
        %v1332 = vadd.f32 %v1290, %v1331
        %v1333 = vpop.f32.mrf.mxu0
        %v1334 = vadd.f32 %v1290, %v1333
        %1335 = vmatmul.bf16.gmra.mxu0 %v1320
        %v1336 = vpop.f32.mrf.mxu0
        %v1337 = vadd.f32 %v1290, %v1336
        %v1338 = vpop.f32.mrf.mxu0
        %v1339 = vadd.f32 %v1290, %v1338
        %1340 = vdwg.mxu0
        %v1341 = vadd.f32 %v923, %v1332
        %v1342 = vadd.f32 %v924, %v1334
        %v1343 = vadd.f32 %v925, %v1337
        %v1344 = vadd.f32 %v926, %v1339
        %1345 = vst [vmem:[%s511] sm:$0xff] %v1341
        %1346 = vst [vmem:[%s511 + $0x8] sm:$0xff] %v1342
        %1347 = vst [vmem:[%s511 + $0x10] sm:$0xff] %v1343
        %1348 = vst [vmem:[%s511 + $0x18] sm:$0xff] %v1344
        %s1349 = sand.u32 %s337, 1
        %s1350 = scalar_lea.sflag [#allocation4], %s1349
        %s1351 = sand.u32 %s337, 1
        %s1352 = smul.addr %s1351, 32
        %s1353 = scalar_lea.vmem [#allocation8], %s1352
        // Predicated region
        $region89: #{tpu_custom_call.1} parent=75 // pred_check
          %p1354 = pneg %p347
        $region90: #{tpu_custom_call.1} parent=75 // pred_check_branch
          %1356 = sbr.rel (%p1354) target = $region92
        $region91: #{tpu_custom_call.1} parent=75 // pred_region
          %s1357 = smul.u32 4, %s30
          %1359 = vsyncadd %s1350, 0
          %s1360 = smul.addr %s1357, 8
          %s1361 = scalar_lea.hbm %s14, %s1360
          %s1362 = sshll.u32 %s1353, 4
          %s1363 = int_to_ptr.vmem [resolvable:$true] %s1362
          %s1364 = sshll.u32 %s1361, 4
          %s1365 = int_to_ptr.hbm [resolvable:$true] %s1364
          %1370 = dma.vmem_to_hbm [thread:$0]  %s1363, 512, %s1365, %s1350, 128, 128, 8
        $region92: #{tpu_custom_call.1} parent=75 // pred_fallthru
          _
      $region76: #{tpu_custom_call.1} parent=5 // pred_fallthru
        _
      %p1371 = scmp.le.s32.totalorder 2, %s25
      // Predicated region
      $region93: #{tpu_custom_call.1} parent=5 // pred_check
        %p1372 = pneg %p1371
      $region94: #{tpu_custom_call.1} parent=5 // pred_check_branch
        %1374 = sbr.rel (%p1372) target = $region96
      $region95: #{tpu_custom_call.1} parent=5 // pred_region
        %s1375 = ssub.s32 %s25, 2
        // Predicated region
        $region97: #{tpu_custom_call.1} parent=95 // pred_check
          %p1376 = pneg %p353
        $region98: #{tpu_custom_call.1} parent=95 // pred_check_branch
          %1378 = sbr.rel (%p1376) target = $region100
        $region99: #{tpu_custom_call.1} parent=95 // pred_region
          %s1379 = sand.u32 %s338, 1
          %s1380 = scalar_lea.sflag [#allocation4], %s1379
          %s1381 = sand.u32 %s338, 1
          %s1382 = smul.addr %s1381, 32
          %s1383 = scalar_lea.vmem [#allocation8], %s1382
          %1385 = dma.done %s1380, 512
        $region100: #{tpu_custom_call.1} parent=95 // pred_fallthru
          _
      $region96: #{tpu_custom_call.1} parent=5 // pred_fallthru
        _
    $region6: #{tpu_custom_call.1} parent=1 // loop_footer
      %s29 = sadd.s32 1, %s25
    $region7: #{tpu_custom_call.1} parent=1 // loop_footer_branch
      %24 = sbr.rel target = $region3
    $region8: #{tpu_custom_call.1} parent=1 // loop_exit
      _
    %1386 = vsyncpa [#allocation3], 1
    %s1387 = scalar_lea.sflag [#allocation3], 1
    %1388 = vsyncpa %s1387, 1
    %1389 = vsyncpa [#allocation6], 1
    %1390 = vsyncpa [#allocation4], 1
    %s1391 = scalar_lea.sflag [#allocation4], 1
    %1392 = vsyncpa %s1391, 1

</llo_original>
